<compile_context>
chip_gen: v7x
topology: tpu7x:2x2x1
jax: 0.10.0
libtpu: 0.0.40
codegen_flags: <defaults>
</compile_context>

<pallas_src>
import jax
import jax.numpy as jnp
from jax import lax
from jax.experimental import pallas as pl
from jax.experimental.pallas import tpu as pltpu


def resblock_kernel(x_ref, w1_ref, b1_ref, w2_ref, b2_ref, alpha_ref, out_ref):
    H, W, C = x_ref.shape                       # full image for this batch n
    TH, _, Cout = out_ref.shape                 # row tile of the output
    alpha = alpha_ref[0]

    t = pl.program_id(1)
    r0 = pl.multiple_of(t * TH, TH)             # first output row of the tile

    def prelu(v):
        return jnp.where(v >= 0.0, v, alpha * v)

    def combine_dx(z, b_ref):
        # z: (R, W, 3*Cout) per-horizontal-tap partial sums (tap dx in lane
        # block dx).  Horizontal replication padding == edge-replicating
        # shifts of the dx=0 / dx=2 taps (lowers to an XLU sublane rotate +
        # merge); then the 3 taps are added.  Only two small 32-lane
        # extractions remain (inherent to Cout=32).
        a0 = z[..., 0:Cout]
        a1 = z[..., Cout:2 * Cout]
        a2 = z[..., 2 * Cout:3 * Cout]
        a0s = jnp.concatenate([a0[:, :1, :], a0[:, :W - 1, :]], axis=1)
        a2s = jnp.concatenate([a2[:, 1:, :], a2[:, W - 1:, :]], axis=1)
        return a0s + a1 + a2s + b_ref[...].reshape(1, 1, Cout)

    def conv(lhs, w_ref, b_ref):
        # lhs: (R, W, 3*Cin) vertically K-packed activations -> one MXU matmul.
        R, _, K = lhs.shape
        z = jnp.dot(lhs.reshape(R * W, K), w_ref[...],
                    preferred_element_type=jnp.float32)
        return combine_dx(z.reshape(R, W, 3 * Cout), b_ref)

    def row(i):
        # One x row, index clamped into the image (= replication pad), (1,W,C).
        return x_ref[pl.ds(jnp.clip(i, 0, H - 1), 1)].astype(jnp.float32)

    # ---- conv1 over TH+2 "slots": slot j holds out1 global row
    # g(j) = clamp(r0 - 1 + j, 0, H-1).  The clamp at the image top/bottom is
    # exactly conv2's replication pad of out1 (slots duplicate the edge row).
    up, mid, dn = [], [], []
    for j in range(TH + 2):                     # static, small trip count
        g = jnp.clip(r0 - 1 + j, 0, H - 1)
        up.append(row(g - 1))                   # vertical tap dy = 0
        mid.append(row(g))                      # dy = 1
        dn.append(row(g + 1))                   # dy = 2
    lhs1 = jnp.concatenate(
        [jnp.concatenate(up, axis=0),
         jnp.concatenate(mid, axis=0),
         jnp.concatenate(dn, axis=0)], axis=-1)             # (TH+2, W, 3C)
    out1 = prelu(conv(lhs1, w1_ref, b1_ref))                # (TH+2, W, Cout)

    # ---- conv2: vertical taps of out1 are free leading-dim slices.
    lhs2 = jnp.concatenate([out1[0:TH], out1[1:TH + 1], out1[2:TH + 2]],
                           axis=-1)                         # (TH, W, 3*Cout)
    residual = conv(lhs2, w2_ref, b2_ref)                   # (TH, W, Cout)

    xt = x_ref[pl.ds(r0, TH)].astype(jnp.float32)           # (TH, W, C)
    out_ref[...] = prelu(xt + residual).astype(out_ref.dtype)


def resblock_pallas(x_nchw, w1, b1, w2, b2, alpha, *, tile_h=None):
    """x_nchw: (N, C, H, W); w: PyTorch (Cout, Cin, 3, 3); b: (Cout,)."""
    N, C, H, W = x_nchw.shape
    Cout = w1.shape[0]
    assert w1.shape == (Cout, C, 3, 3) and w2.shape == (Cout, C, 3, 3)
    assert b1.shape == (Cout,) and b2.shape == (Cout,)
    # The module's forward only type-checks when in_channels == 32 (conv2's
    # input channels and the residual add), i.e. C == Cout.
    assert C == Cout, "Resblock forward requires in_channels == 32"

    if tile_h is None:
        tile_h = min(H, 32)
    while H % tile_h:                 # tile must divide H
        tile_h -= 1
    n_tiles = H // tile_h
    # TODO(synk): for very large images the x block is still the whole image;
    # a halo'd manual-DMA row fetch (pl.ANY + make_async_copy) would bound the
    # input-side VMEM as well.

    x = jnp.transpose(x_nchw, (0, 2, 3, 1))                 # NHWC

    def pack(w):
        # (Cout, Cin, 3, 3) -> (3*Cin, 3*Cout):
        #   row block dy   holds the (Cin, .) weights of vertical tap dy,
        #   column block dx holds horizontal tap dx.
        return jnp.transpose(w, (2, 1, 3, 0)).reshape(3 * C, 3 * Cout)

    w1p = pack(w1).astype(jnp.float32)
    w2p = pack(w2).astype(jnp.float32)
    b1r = b1.reshape(1, Cout).astype(jnp.float32)
    b2r = b2.reshape(1, Cout).astype(jnp.float32)
    alpha_arr = jnp.asarray(alpha, jnp.float32).reshape(1)

    out_nhwc = pl.pallas_call(
        resblock_kernel,
        out_shape=jax.ShapeDtypeStruct((N, H, W, Cout), x.dtype),
        grid=(N, n_tiles),
        in_specs=[
            # Full image per batch element; constant over the row-tile axis so
            # it stays VMEM-resident across tiles (no re-DMA on a single TC).
            pl.BlockSpec((None, H, W, C), lambda n, t: (n, 0, 0, 0)),
            pl.BlockSpec((3 * C, 3 * Cout), lambda n, t: (0, 0)),
            pl.BlockSpec((1, Cout), lambda n, t: (0, 0)),
            pl.BlockSpec((3 * C, 3 * Cout), lambda n, t: (0, 0)),
            pl.BlockSpec((1, Cout), lambda n, t: (0, 0)),
            pl.BlockSpec(memory_space=pltpu.MemorySpace.SMEM),   # alpha scalar
        ],
        out_specs=pl.BlockSpec((None, tile_h, W, Cout),
                               lambda n, t: (n, t, 0, 0)),
        compiler_params=pltpu.CompilerParams(
            dimension_semantics=("parallel", "parallel"),
            vmem_limit_bytes=32 * 1024 * 1024),
    )(x, w1p, b1r, w2p, b2r, alpha_arr)

    return jnp.transpose(out_nhwc, (0, 3, 1, 2))            # back to NCHW


def resblock_ref(x_nchw, w1, b1, w2, b2, alpha):
    """Pure-JAX reference (NHWC internally), matching PyTorch semantics."""
    x = jnp.transpose(x_nchw, (0, 2, 3, 1))

    def conv(inp, w, b):
        inp_p = jnp.pad(inp, ((0, 0), (1, 1), (1, 1), (0, 0)), mode="edge")
        out = lax.conv_general_dilated(
            inp_p, jnp.transpose(w, (2, 3, 1, 0)),
            window_strides=(1, 1), padding="VALID",
            dimension_numbers=("NHWC", "HWIO", "NHWC"))
        return out + b

    def prelu(v):
        return jnp.where(v >= 0, v, alpha * v)

    out1 = prelu(conv(x, w1, b1))
    res = conv(out1, w2, b2)
    out = prelu(x + res)
    return jnp.transpose(out, (0, 3, 1, 2))


if __name__ == "__main__":
    N, C, H, W = 2, 32, 16, 16   # in_channels must be 32 (see note above)
    COUT = 32

    key = jax.random.PRNGKey(0)
    kx, kw1, kb1, kw2, kb2 = jax.random.split(key, 5)

    x = jax.random.normal(kx, (N, C, H, W), dtype=jnp.float32)
    # deterministic synthetic params (PyTorch layout: (Cout, Cin, kh, kw))
    w1 = 0.1 * jax.random.normal(kw1, (COUT, C, 3, 3), dtype=jnp.float32)
    b1 = 0.1 * jax.random.normal(kb1, (COUT,), dtype=jnp.float32)
    w2 = 0.1 * jax.random.normal(kw2, (COUT, C, 3, 3), dtype=jnp.float32)
    b2 = 0.1 * jax.random.normal(kb2, (COUT,), dtype=jnp.float32)
    alpha = jnp.float32(0.25)    # nn.PReLU() default single parameter

    # tile_h=8 -> grid (2, 2): exercises the row-tiled path incl. both edge
    # tiles and gives >=2 parallel steps per axis.
    out = resblock_pallas(x, w1, b1, w2, b2, alpha, tile_h=8)
    out = jax.block_until_ready(out)

    ref = resblock_ref(x, w1, b1, w2, b2, alpha)
    assert out.shape == (N, COUT, H, W)
    assert jnp.allclose(out, ref, atol=2e-4, rtol=2e-4), (
        float(jnp.max(jnp.abs(out - ref))))

    print("KERNEL_OK")
</pallas_src>

<mosaic_0001>
module attributes {stable_mosaic.version = 11 : i64} {
  func.func @resblock_kernel(%arg0: i32, %arg1: i32, %arg2: memref<1x16x16x32xf32, #tpu.memory_space<vmem>>, %arg3: memref<96x96xf32, #tpu.memory_space<vmem>>, %arg4: memref<1x32xf32, #tpu.memory_space<vmem>>, %arg5: memref<96x96xf32, #tpu.memory_space<vmem>>, %arg6: memref<1x32xf32, #tpu.memory_space<vmem>>, %arg7: memref<1xf32, #tpu.memory_space<smem>>, %arg8: memref<1x8x16x32xf32, #tpu.memory_space<vmem>>) attributes {dimension_semantics = [#tpu.dimension_semantics<parallel>, #tpu.dimension_semantics<parallel>], iteration_bounds = array<i64: 2, 2>, scalar_prefetch = 0 : i64, scratch_operands = 0 : i64, tpu.core_type = #tpu.core_type<tc>, window_params = [{transform_indices = @transform_0, window_bounds = array<i64: 1, 16, 16, 32>}, {pipeline_mode = #tpu.pipeline_mode<synchronous>, transform_indices = @transform_1, window_bounds = array<i64: 96, 96>}, {pipeline_mode = #tpu.pipeline_mode<synchronous>, transform_indices = @transform_2, window_bounds = array<i64: 1, 32>}, {pipeline_mode = #tpu.pipeline_mode<synchronous>, transform_indices = @transform_3, window_bounds = array<i64: 96, 96>}, {pipeline_mode = #tpu.pipeline_mode<synchronous>, transform_indices = @transform_4, window_bounds = array<i64: 1, 32>}, {transform_indices = @transform_5, window_bounds = array<i64: 1>}, {transform_indices = @transform_6, window_bounds = array<i64: 1, 8, 16, 32>}]} {
    %c0 = arith.constant 0 : index
    %0 = memref.load %arg7[%c0] : memref<1xf32, #tpu.memory_space<smem>>
    %c8_i32 = arith.constant 8 : i32
    %1 = arith.muli %arg1, %c8_i32 : i32
    %2 = tpu.assume_multiple %1, 8 : i32
    %c1_i32 = arith.constant 1 : i32
    %3 = arith.subi %2, %c1_i32 : i32
    %c0_i32 = arith.constant 0 : i32
    %4 = arith.addi %3, %c0_i32 : i32
    %c0_i32_0 = arith.constant 0 : i32
    %c15_i32 = arith.constant 15 : i32
    %5 = arith.maxsi %c0_i32_0, %4 : i32
    %6 = arith.minsi %c15_i32, %5 : i32
    %c1_i32_1 = arith.constant 1 : i32
    %7 = arith.subi %6, %c1_i32_1 : i32
    %c0_i32_2 = arith.constant 0 : i32
    %c15_i32_3 = arith.constant 15 : i32
    %8 = arith.maxsi %c0_i32_2, %7 : i32
    %9 = arith.minsi %c15_i32_3, %8 : i32
    %c0_4 = arith.constant 0 : index
    %10 = arith.index_cast %9 : i32 to index
    %c0_5 = arith.constant 0 : index
    %c0_6 = arith.constant 0 : index
    %11 = vector.load %arg2[%c0_4, %10, %c0_5, %c0_6] : memref<1x16x16x32xf32, #tpu.memory_space<vmem>>, vector<1x1x16x32xf32>
    %12 = vector.shape_cast %11 : vector<1x1x16x32xf32> to vector<1x16x32xf32>
    %c0_i32_7 = arith.constant 0 : i32
    %c15_i32_8 = arith.constant 15 : i32
    %13 = arith.maxsi %c0_i32_7, %6 : i32
    %14 = arith.minsi %c15_i32_8, %13 : i32
    %c0_9 = arith.constant 0 : index
    %15 = arith.index_cast %14 : i32 to index
    %c0_10 = arith.constant 0 : index
    %c0_11 = arith.constant 0 : index
    %16 = vector.load %arg2[%c0_9, %15, %c0_10, %c0_11] : memref<1x16x16x32xf32, #tpu.memory_space<vmem>>, vector<1x1x16x32xf32>
    %17 = vector.shape_cast %16 : vector<1x1x16x32xf32> to vector<1x16x32xf32>
    %c1_i32_12 = arith.constant 1 : i32
    %18 = arith.addi %6, %c1_i32_12 : i32
    %c0_i32_13 = arith.constant 0 : i32
    %c15_i32_14 = arith.constant 15 : i32
    %19 = arith.maxsi %c0_i32_13, %18 : i32
    %20 = arith.minsi %c15_i32_14, %19 : i32
    %c0_15 = arith.constant 0 : index
    %21 = arith.index_cast %20 : i32 to index
    %c0_16 = arith.constant 0 : index
    %c0_17 = arith.constant 0 : index
    %22 = vector.load %arg2[%c0_15, %21, %c0_16, %c0_17] : memref<1x16x16x32xf32, #tpu.memory_space<vmem>>, vector<1x1x16x32xf32>
    %23 = vector.shape_cast %22 : vector<1x1x16x32xf32> to vector<1x16x32xf32>
    %c1_i32_18 = arith.constant 1 : i32
    %24 = arith.subi %2, %c1_i32_18 : i32
    %c1_i32_19 = arith.constant 1 : i32
    %25 = arith.addi %24, %c1_i32_19 : i32
    %c0_i32_20 = arith.constant 0 : i32
    %c15_i32_21 = arith.constant 15 : i32
    %26 = arith.maxsi %c0_i32_20, %25 : i32
    %27 = arith.minsi %c15_i32_21, %26 : i32
    %c1_i32_22 = arith.constant 1 : i32
    %28 = arith.subi %27, %c1_i32_22 : i32
    %c0_i32_23 = arith.constant 0 : i32
    %c15_i32_24 = arith.constant 15 : i32
    %29 = arith.maxsi %c0_i32_23, %28 : i32
    %30 = arith.minsi %c15_i32_24, %29 : i32
    %c0_25 = arith.constant 0 : index
    %31 = arith.index_cast %30 : i32 to index
    %c0_26 = arith.constant 0 : index
    %c0_27 = arith.constant 0 : index
    %32 = vector.load %arg2[%c0_25, %31, %c0_26, %c0_27] : memref<1x16x16x32xf32, #tpu.memory_space<vmem>>, vector<1x1x16x32xf32>
    %33 = vector.shape_cast %32 : vector<1x1x16x32xf32> to vector<1x16x32xf32>
    %c0_i32_28 = arith.constant 0 : i32
    %c15_i32_29 = arith.constant 15 : i32
    %34 = arith.maxsi %c0_i32_28, %27 : i32
    %35 = arith.minsi %c15_i32_29, %34 : i32
    %c0_30 = arith.constant 0 : index
    %36 = arith.index_cast %35 : i32 to index
    %c0_31 = arith.constant 0 : index
    %c0_32 = arith.constant 0 : index
    %37 = vector.load %arg2[%c0_30, %36, %c0_31, %c0_32] : memref<1x16x16x32xf32, #tpu.memory_space<vmem>>, vector<1x1x16x32xf32>
    %38 = vector.shape_cast %37 : vector<1x1x16x32xf32> to vector<1x16x32xf32>
    %c1_i32_33 = arith.constant 1 : i32
    %39 = arith.addi %27, %c1_i32_33 : i32
    %c0_i32_34 = arith.constant 0 : i32
    %c15_i32_35 = arith.constant 15 : i32
    %40 = arith.maxsi %c0_i32_34, %39 : i32
    %41 = arith.minsi %c15_i32_35, %40 : i32
    %c0_36 = arith.constant 0 : index
    %42 = arith.index_cast %41 : i32 to index
    %c0_37 = arith.constant 0 : index
    %c0_38 = arith.constant 0 : index
    %43 = vector.load %arg2[%c0_36, %42, %c0_37, %c0_38] : memref<1x16x16x32xf32, #tpu.memory_space<vmem>>, vector<1x1x16x32xf32>
    %44 = vector.shape_cast %43 : vector<1x1x16x32xf32> to vector<1x16x32xf32>
    %c1_i32_39 = arith.constant 1 : i32
    %45 = arith.subi %2, %c1_i32_39 : i32
    %c2_i32 = arith.constant 2 : i32
    %46 = arith.addi %45, %c2_i32 : i32
    %c0_i32_40 = arith.constant 0 : i32
    %c15_i32_41 = arith.constant 15 : i32
    %47 = arith.maxsi %c0_i32_40, %46 : i32
    %48 = arith.minsi %c15_i32_41, %47 : i32
    %c1_i32_42 = arith.constant 1 : i32
    %49 = arith.subi %48, %c1_i32_42 : i32
    %c0_i32_43 = arith.constant 0 : i32
    %c15_i32_44 = arith.constant 15 : i32
    %50 = arith.maxsi %c0_i32_43, %49 : i32
    %51 = arith.minsi %c15_i32_44, %50 : i32
    %c0_45 = arith.constant 0 : index
    %52 = arith.index_cast %51 : i32 to index
    %c0_46 = arith.constant 0 : index
    %c0_47 = arith.constant 0 : index
    %53 = vector.load %arg2[%c0_45, %52, %c0_46, %c0_47] : memref<1x16x16x32xf32, #tpu.memory_space<vmem>>, vector<1x1x16x32xf32>
    %54 = vector.shape_cast %53 : vector<1x1x16x32xf32> to vector<1x16x32xf32>
    %c0_i32_48 = arith.constant 0 : i32
    %c15_i32_49 = arith.constant 15 : i32
    %55 = arith.maxsi %c0_i32_48, %48 : i32
    %56 = arith.minsi %c15_i32_49, %55 : i32
    %c0_50 = arith.constant 0 : index
    %57 = arith.index_cast %56 : i32 to index
    %c0_51 = arith.constant 0 : index
    %c0_52 = arith.constant 0 : index
    %58 = vector.load %arg2[%c0_50, %57, %c0_51, %c0_52] : memref<1x16x16x32xf32, #tpu.memory_space<vmem>>, vector<1x1x16x32xf32>
    %59 = vector.shape_cast %58 : vector<1x1x16x32xf32> to vector<1x16x32xf32>
    %c1_i32_53 = arith.constant 1 : i32
    %60 = arith.addi %48, %c1_i32_53 : i32
    %c0_i32_54 = arith.constant 0 : i32
    %c15_i32_55 = arith.constant 15 : i32
    %61 = arith.maxsi %c0_i32_54, %60 : i32
    %62 = arith.minsi %c15_i32_55, %61 : i32
    %c0_56 = arith.constant 0 : index
    %63 = arith.index_cast %62 : i32 to index
    %c0_57 = arith.constant 0 : index
    %c0_58 = arith.constant 0 : index
    %64 = vector.load %arg2[%c0_56, %63, %c0_57, %c0_58] : memref<1x16x16x32xf32, #tpu.memory_space<vmem>>, vector<1x1x16x32xf32>
    %65 = vector.shape_cast %64 : vector<1x1x16x32xf32> to vector<1x16x32xf32>
    %c1_i32_59 = arith.constant 1 : i32
    %66 = arith.subi %2, %c1_i32_59 : i32
    %c3_i32 = arith.constant 3 : i32
    %67 = arith.addi %66, %c3_i32 : i32
    %c0_i32_60 = arith.constant 0 : i32
    %c15_i32_61 = arith.constant 15 : i32
    %68 = arith.maxsi %c0_i32_60, %67 : i32
    %69 = arith.minsi %c15_i32_61, %68 : i32
    %c1_i32_62 = arith.constant 1 : i32
    %70 = arith.subi %69, %c1_i32_62 : i32
    %c0_i32_63 = arith.constant 0 : i32
    %c15_i32_64 = arith.constant 15 : i32
    %71 = arith.maxsi %c0_i32_63, %70 : i32
    %72 = arith.minsi %c15_i32_64, %71 : i32
    %c0_65 = arith.constant 0 : index
    %73 = arith.index_cast %72 : i32 to index
    %c0_66 = arith.constant 0 : index
    %c0_67 = arith.constant 0 : index
    %74 = vector.load %arg2[%c0_65, %73, %c0_66, %c0_67] : memref<1x16x16x32xf32, #tpu.memory_space<vmem>>, vector<1x1x16x32xf32>
    %75 = vector.shape_cast %74 : vector<1x1x16x32xf32> to vector<1x16x32xf32>
    %c0_i32_68 = arith.constant 0 : i32
    %c15_i32_69 = arith.constant 15 : i32
    %76 = arith.maxsi %c0_i32_68, %69 : i32
    %77 = arith.minsi %c15_i32_69, %76 : i32
    %c0_70 = arith.constant 0 : index
    %78 = arith.index_cast %77 : i32 to index
    %c0_71 = arith.constant 0 : index
    %c0_72 = arith.constant 0 : index
    %79 = vector.load %arg2[%c0_70, %78, %c0_71, %c0_72] : memref<1x16x16x32xf32, #tpu.memory_space<vmem>>, vector<1x1x16x32xf32>
    %80 = vector.shape_cast %79 : vector<1x1x16x32xf32> to vector<1x16x32xf32>
    %c1_i32_73 = arith.constant 1 : i32
    %81 = arith.addi %69, %c1_i32_73 : i32
    %c0_i32_74 = arith.constant 0 : i32
    %c15_i32_75 = arith.constant 15 : i32
    %82 = arith.maxsi %c0_i32_74, %81 : i32
    %83 = arith.minsi %c15_i32_75, %82 : i32
    %c0_76 = arith.constant 0 : index
    %84 = arith.index_cast %83 : i32 to index
    %c0_77 = arith.constant 0 : index
    %c0_78 = arith.constant 0 : index
    %85 = vector.load %arg2[%c0_76, %84, %c0_77, %c0_78] : memref<1x16x16x32xf32, #tpu.memory_space<vmem>>, vector<1x1x16x32xf32>
    %86 = vector.shape_cast %85 : vector<1x1x16x32xf32> to vector<1x16x32xf32>
    %c1_i32_79 = arith.constant 1 : i32
    %87 = arith.subi %2, %c1_i32_79 : i32
    %c4_i32 = arith.constant 4 : i32
    %88 = arith.addi %87, %c4_i32 : i32
    %c0_i32_80 = arith.constant 0 : i32
    %c15_i32_81 = arith.constant 15 : i32
    %89 = arith.maxsi %c0_i32_80, %88 : i32
    %90 = arith.minsi %c15_i32_81, %89 : i32
    %c1_i32_82 = arith.constant 1 : i32
    %91 = arith.subi %90, %c1_i32_82 : i32
    %c0_i32_83 = arith.constant 0 : i32
    %c15_i32_84 = arith.constant 15 : i32
    %92 = arith.maxsi %c0_i32_83, %91 : i32
    %93 = arith.minsi %c15_i32_84, %92 : i32
    %c0_85 = arith.constant 0 : index
    %94 = arith.index_cast %93 : i32 to index
    %c0_86 = arith.constant 0 : index
    %c0_87 = arith.constant 0 : index
    %95 = vector.load %arg2[%c0_85, %94, %c0_86, %c0_87] : memref<1x16x16x32xf32, #tpu.memory_space<vmem>>, vector<1x1x16x32xf32>
    %96 = vector.shape_cast %95 : vector<1x1x16x32xf32> to vector<1x16x32xf32>
    %c0_i32_88 = arith.constant 0 : i32
    %c15_i32_89 = arith.constant 15 : i32
    %97 = arith.maxsi %c0_i32_88, %90 : i32
    %98 = arith.minsi %c15_i32_89, %97 : i32
    %c0_90 = arith.constant 0 : index
    %99 = arith.index_cast %98 : i32 to index
    %c0_91 = arith.constant 0 : index
    %c0_92 = arith.constant 0 : index
    %100 = vector.load %arg2[%c0_90, %99, %c0_91, %c0_92] : memref<1x16x16x32xf32, #tpu.memory_space<vmem>>, vector<1x1x16x32xf32>
    %101 = vector.shape_cast %100 : vector<1x1x16x32xf32> to vector<1x16x32xf32>
    %c1_i32_93 = arith.constant 1 : i32
    %102 = arith.addi %90, %c1_i32_93 : i32
    %c0_i32_94 = arith.constant 0 : i32
    %c15_i32_95 = arith.constant 15 : i32
    %103 = arith.maxsi %c0_i32_94, %102 : i32
    %104 = arith.minsi %c15_i32_95, %103 : i32
    %c0_96 = arith.constant 0 : index
    %105 = arith.index_cast %104 : i32 to index
    %c0_97 = arith.constant 0 : index
    %c0_98 = arith.constant 0 : index
    %106 = vector.load %arg2[%c0_96, %105, %c0_97, %c0_98] : memref<1x16x16x32xf32, #tpu.memory_space<vmem>>, vector<1x1x16x32xf32>
    %107 = vector.shape_cast %106 : vector<1x1x16x32xf32> to vector<1x16x32xf32>
    %c1_i32_99 = arith.constant 1 : i32
    %108 = arith.subi %2, %c1_i32_99 : i32
    %c5_i32 = arith.constant 5 : i32
    %109 = arith.addi %108, %c5_i32 : i32
    %c0_i32_100 = arith.constant 0 : i32
    %c15_i32_101 = arith.constant 15 : i32
    %110 = arith.maxsi %c0_i32_100, %109 : i32
    %111 = arith.minsi %c15_i32_101, %110 : i32
    %c1_i32_102 = arith.constant 1 : i32
    %112 = arith.subi %111, %c1_i32_102 : i32
    %c0_i32_103 = arith.constant 0 : i32
    %c15_i32_104 = arith.constant 15 : i32
    %113 = arith.maxsi %c0_i32_103, %112 : i32
    %114 = arith.minsi %c15_i32_104, %113 : i32
    %c0_105 = arith.constant 0 : index
    %115 = arith.index_cast %114 : i32 to index
    %c0_106 = arith.constant 0 : index
    %c0_107 = arith.constant 0 : index
    %116 = vector.load %arg2[%c0_105, %115, %c0_106, %c0_107] : memref<1x16x16x32xf32, #tpu.memory_space<vmem>>, vector<1x1x16x32xf32>
    %117 = vector.shape_cast %116 : vector<1x1x16x32xf32> to vector<1x16x32xf32>
    %c0_i32_108 = arith.constant 0 : i32
    %c15_i32_109 = arith.constant 15 : i32
    %118 = arith.maxsi %c0_i32_108, %111 : i32
    %119 = arith.minsi %c15_i32_109, %118 : i32
    %c0_110 = arith.constant 0 : index
    %120 = arith.index_cast %119 : i32 to index
    %c0_111 = arith.constant 0 : index
    %c0_112 = arith.constant 0 : index
    %121 = vector.load %arg2[%c0_110, %120, %c0_111, %c0_112] : memref<1x16x16x32xf32, #tpu.memory_space<vmem>>, vector<1x1x16x32xf32>
    %122 = vector.shape_cast %121 : vector<1x1x16x32xf32> to vector<1x16x32xf32>
    %c1_i32_113 = arith.constant 1 : i32
    %123 = arith.addi %111, %c1_i32_113 : i32
    %c0_i32_114 = arith.constant 0 : i32
    %c15_i32_115 = arith.constant 15 : i32
    %124 = arith.maxsi %c0_i32_114, %123 : i32
    %125 = arith.minsi %c15_i32_115, %124 : i32
    %c0_116 = arith.constant 0 : index
    %126 = arith.index_cast %125 : i32 to index
    %c0_117 = arith.constant 0 : index
    %c0_118 = arith.constant 0 : index
    %127 = vector.load %arg2[%c0_116, %126, %c0_117, %c0_118] : memref<1x16x16x32xf32, #tpu.memory_space<vmem>>, vector<1x1x16x32xf32>
    %128 = vector.shape_cast %127 : vector<1x1x16x32xf32> to vector<1x16x32xf32>
    %c1_i32_119 = arith.constant 1 : i32
    %129 = arith.subi %2, %c1_i32_119 : i32
    %c6_i32 = arith.constant 6 : i32
    %130 = arith.addi %129, %c6_i32 : i32
    %c0_i32_120 = arith.constant 0 : i32
    %c15_i32_121 = arith.constant 15 : i32
    %131 = arith.maxsi %c0_i32_120, %130 : i32
    %132 = arith.minsi %c15_i32_121, %131 : i32
    %c1_i32_122 = arith.constant 1 : i32
    %133 = arith.subi %132, %c1_i32_122 : i32
    %c0_i32_123 = arith.constant 0 : i32
    %c15_i32_124 = arith.constant 15 : i32
    %134 = arith.maxsi %c0_i32_123, %133 : i32
    %135 = arith.minsi %c15_i32_124, %134 : i32
    %c0_125 = arith.constant 0 : index
    %136 = arith.index_cast %135 : i32 to index
    %c0_126 = arith.constant 0 : index
    %c0_127 = arith.constant 0 : index
    %137 = vector.load %arg2[%c0_125, %136, %c0_126, %c0_127] : memref<1x16x16x32xf32, #tpu.memory_space<vmem>>, vector<1x1x16x32xf32>
    %138 = vector.shape_cast %137 : vector<1x1x16x32xf32> to vector<1x16x32xf32>
    %c0_i32_128 = arith.constant 0 : i32
    %c15_i32_129 = arith.constant 15 : i32
    %139 = arith.maxsi %c0_i32_128, %132 : i32
    %140 = arith.minsi %c15_i32_129, %139 : i32
    %c0_130 = arith.constant 0 : index
    %141 = arith.index_cast %140 : i32 to index
    %c0_131 = arith.constant 0 : index
    %c0_132 = arith.constant 0 : index
    %142 = vector.load %arg2[%c0_130, %141, %c0_131, %c0_132] : memref<1x16x16x32xf32, #tpu.memory_space<vmem>>, vector<1x1x16x32xf32>
    %143 = vector.shape_cast %142 : vector<1x1x16x32xf32> to vector<1x16x32xf32>
    %c1_i32_133 = arith.constant 1 : i32
    %144 = arith.addi %132, %c1_i32_133 : i32
    %c0_i32_134 = arith.constant 0 : i32
    %c15_i32_135 = arith.constant 15 : i32
    %145 = arith.maxsi %c0_i32_134, %144 : i32
    %146 = arith.minsi %c15_i32_135, %145 : i32
    %c0_136 = arith.constant 0 : index
    %147 = arith.index_cast %146 : i32 to index
    %c0_137 = arith.constant 0 : index
    %c0_138 = arith.constant 0 : index
    %148 = vector.load %arg2[%c0_136, %147, %c0_137, %c0_138] : memref<1x16x16x32xf32, #tpu.memory_space<vmem>>, vector<1x1x16x32xf32>
    %149 = vector.shape_cast %148 : vector<1x1x16x32xf32> to vector<1x16x32xf32>
    %c1_i32_139 = arith.constant 1 : i32
    %150 = arith.subi %2, %c1_i32_139 : i32
    %c7_i32 = arith.constant 7 : i32
    %151 = arith.addi %150, %c7_i32 : i32
    %c0_i32_140 = arith.constant 0 : i32
    %c15_i32_141 = arith.constant 15 : i32
    %152 = arith.maxsi %c0_i32_140, %151 : i32
    %153 = arith.minsi %c15_i32_141, %152 : i32
    %c1_i32_142 = arith.constant 1 : i32
    %154 = arith.subi %153, %c1_i32_142 : i32
    %c0_i32_143 = arith.constant 0 : i32
    %c15_i32_144 = arith.constant 15 : i32
    %155 = arith.maxsi %c0_i32_143, %154 : i32
    %156 = arith.minsi %c15_i32_144, %155 : i32
    %c0_145 = arith.constant 0 : index
    %157 = arith.index_cast %156 : i32 to index
    %c0_146 = arith.constant 0 : index
    %c0_147 = arith.constant 0 : index
    %158 = vector.load %arg2[%c0_145, %157, %c0_146, %c0_147] : memref<1x16x16x32xf32, #tpu.memory_space<vmem>>, vector<1x1x16x32xf32>
    %159 = vector.shape_cast %158 : vector<1x1x16x32xf32> to vector<1x16x32xf32>
    %c0_i32_148 = arith.constant 0 : i32
    %c15_i32_149 = arith.constant 15 : i32
    %160 = arith.maxsi %c0_i32_148, %153 : i32
    %161 = arith.minsi %c15_i32_149, %160 : i32
    %c0_150 = arith.constant 0 : index
    %162 = arith.index_cast %161 : i32 to index
    %c0_151 = arith.constant 0 : index
    %c0_152 = arith.constant 0 : index
    %163 = vector.load %arg2[%c0_150, %162, %c0_151, %c0_152] : memref<1x16x16x32xf32, #tpu.memory_space<vmem>>, vector<1x1x16x32xf32>
    %164 = vector.shape_cast %163 : vector<1x1x16x32xf32> to vector<1x16x32xf32>
    %c1_i32_153 = arith.constant 1 : i32
    %165 = arith.addi %153, %c1_i32_153 : i32
    %c0_i32_154 = arith.constant 0 : i32
    %c15_i32_155 = arith.constant 15 : i32
    %166 = arith.maxsi %c0_i32_154, %165 : i32
    %167 = arith.minsi %c15_i32_155, %166 : i32
    %c0_156 = arith.constant 0 : index
    %168 = arith.index_cast %167 : i32 to index
    %c0_157 = arith.constant 0 : index
    %c0_158 = arith.constant 0 : index
    %169 = vector.load %arg2[%c0_156, %168, %c0_157, %c0_158] : memref<1x16x16x32xf32, #tpu.memory_space<vmem>>, vector<1x1x16x32xf32>
    %170 = vector.shape_cast %169 : vector<1x1x16x32xf32> to vector<1x16x32xf32>
    %c1_i32_159 = arith.constant 1 : i32
    %171 = arith.subi %2, %c1_i32_159 : i32
    %c8_i32_160 = arith.constant 8 : i32
    %172 = arith.addi %171, %c8_i32_160 : i32
    %c0_i32_161 = arith.constant 0 : i32
    %c15_i32_162 = arith.constant 15 : i32
    %173 = arith.maxsi %c0_i32_161, %172 : i32
    %174 = arith.minsi %c15_i32_162, %173 : i32
    %c1_i32_163 = arith.constant 1 : i32
    %175 = arith.subi %174, %c1_i32_163 : i32
    %c0_i32_164 = arith.constant 0 : i32
    %c15_i32_165 = arith.constant 15 : i32
    %176 = arith.maxsi %c0_i32_164, %175 : i32
    %177 = arith.minsi %c15_i32_165, %176 : i32
    %c0_166 = arith.constant 0 : index
    %178 = arith.index_cast %177 : i32 to index
    %c0_167 = arith.constant 0 : index
    %c0_168 = arith.constant 0 : index
    %179 = vector.load %arg2[%c0_166, %178, %c0_167, %c0_168] : memref<1x16x16x32xf32, #tpu.memory_space<vmem>>, vector<1x1x16x32xf32>
    %180 = vector.shape_cast %179 : vector<1x1x16x32xf32> to vector<1x16x32xf32>
    %c0_i32_169 = arith.constant 0 : i32
    %c15_i32_170 = arith.constant 15 : i32
    %181 = arith.maxsi %c0_i32_169, %174 : i32
    %182 = arith.minsi %c15_i32_170, %181 : i32
    %c0_171 = arith.constant 0 : index
    %183 = arith.index_cast %182 : i32 to index
    %c0_172 = arith.constant 0 : index
    %c0_173 = arith.constant 0 : index
    %184 = vector.load %arg2[%c0_171, %183, %c0_172, %c0_173] : memref<1x16x16x32xf32, #tpu.memory_space<vmem>>, vector<1x1x16x32xf32>
    %185 = vector.shape_cast %184 : vector<1x1x16x32xf32> to vector<1x16x32xf32>
    %c1_i32_174 = arith.constant 1 : i32
    %186 = arith.addi %174, %c1_i32_174 : i32
    %c0_i32_175 = arith.constant 0 : i32
    %c15_i32_176 = arith.constant 15 : i32
    %187 = arith.maxsi %c0_i32_175, %186 : i32
    %188 = arith.minsi %c15_i32_176, %187 : i32
    %c0_177 = arith.constant 0 : index
    %189 = arith.index_cast %188 : i32 to index
    %c0_178 = arith.constant 0 : index
    %c0_179 = arith.constant 0 : index
    %190 = vector.load %arg2[%c0_177, %189, %c0_178, %c0_179] : memref<1x16x16x32xf32, #tpu.memory_space<vmem>>, vector<1x1x16x32xf32>
    %191 = vector.shape_cast %190 : vector<1x1x16x32xf32> to vector<1x16x32xf32>
    %c1_i32_180 = arith.constant 1 : i32
    %192 = arith.subi %2, %c1_i32_180 : i32
    %c9_i32 = arith.constant 9 : i32
    %193 = arith.addi %192, %c9_i32 : i32
    %c0_i32_181 = arith.constant 0 : i32
    %c15_i32_182 = arith.constant 15 : i32
    %194 = arith.maxsi %c0_i32_181, %193 : i32
    %195 = arith.minsi %c15_i32_182, %194 : i32
    %c1_i32_183 = arith.constant 1 : i32
    %196 = arith.subi %195, %c1_i32_183 : i32
    %c0_i32_184 = arith.constant 0 : i32
    %c15_i32_185 = arith.constant 15 : i32
    %197 = arith.maxsi %c0_i32_184, %196 : i32
    %198 = arith.minsi %c15_i32_185, %197 : i32
    %c0_186 = arith.constant 0 : index
    %199 = arith.index_cast %198 : i32 to index
    %c0_187 = arith.constant 0 : index
    %c0_188 = arith.constant 0 : index
    %200 = vector.load %arg2[%c0_186, %199, %c0_187, %c0_188] : memref<1x16x16x32xf32, #tpu.memory_space<vmem>>, vector<1x1x16x32xf32>
    %201 = vector.shape_cast %200 : vector<1x1x16x32xf32> to vector<1x16x32xf32>
    %c0_i32_189 = arith.constant 0 : i32
    %c15_i32_190 = arith.constant 15 : i32
    %202 = arith.maxsi %c0_i32_189, %195 : i32
    %203 = arith.minsi %c15_i32_190, %202 : i32
    %c0_191 = arith.constant 0 : index
    %204 = arith.index_cast %203 : i32 to index
    %c0_192 = arith.constant 0 : index
    %c0_193 = arith.constant 0 : index
    %205 = vector.load %arg2[%c0_191, %204, %c0_192, %c0_193] : memref<1x16x16x32xf32, #tpu.memory_space<vmem>>, vector<1x1x16x32xf32>
    %206 = vector.shape_cast %205 : vector<1x1x16x32xf32> to vector<1x16x32xf32>
    %c1_i32_194 = arith.constant 1 : i32
    %207 = arith.addi %195, %c1_i32_194 : i32
    %c0_i32_195 = arith.constant 0 : i32
    %c15_i32_196 = arith.constant 15 : i32
    %208 = arith.maxsi %c0_i32_195, %207 : i32
    %209 = arith.minsi %c15_i32_196, %208 : i32
    %c0_197 = arith.constant 0 : index
    %210 = arith.index_cast %209 : i32 to index
    %c0_198 = arith.constant 0 : index
    %c0_199 = arith.constant 0 : index
    %211 = vector.load %arg2[%c0_197, %210, %c0_198, %c0_199] : memref<1x16x16x32xf32, #tpu.memory_space<vmem>>, vector<1x1x16x32xf32>
    %212 = vector.shape_cast %211 : vector<1x1x16x32xf32> to vector<1x16x32xf32>
    %213 = tpu.concatenate %12, %33, %54, %75, %96, %117, %138, %159, %180, %201 in 0 : vector<1x16x32xf32>, vector<1x16x32xf32>, vector<1x16x32xf32>, vector<1x16x32xf32>, vector<1x16x32xf32>, vector<1x16x32xf32>, vector<1x16x32xf32>, vector<1x16x32xf32>, vector<1x16x32xf32>, vector<1x16x32xf32> -> vector<10x16x32xf32>
    %214 = tpu.concatenate %17, %38, %59, %80, %101, %122, %143, %164, %185, %206 in 0 : vector<1x16x32xf32>, vector<1x16x32xf32>, vector<1x16x32xf32>, vector<1x16x32xf32>, vector<1x16x32xf32>, vector<1x16x32xf32>, vector<1x16x32xf32>, vector<1x16x32xf32>, vector<1x16x32xf32>, vector<1x16x32xf32> -> vector<10x16x32xf32>
    %215 = tpu.concatenate %23, %44, %65, %86, %107, %128, %149, %170, %191, %212 in 0 : vector<1x16x32xf32>, vector<1x16x32xf32>, vector<1x16x32xf32>, vector<1x16x32xf32>, vector<1x16x32xf32>, vector<1x16x32xf32>, vector<1x16x32xf32>, vector<1x16x32xf32>, vector<1x16x32xf32>, vector<1x16x32xf32> -> vector<10x16x32xf32>
    %216 = tpu.concatenate %213, %214, %215 in 2 : vector<10x16x32xf32>, vector<10x16x32xf32>, vector<10x16x32xf32> -> vector<10x16x96xf32>
    %217 = vector.shape_cast %216 : vector<10x16x96xf32> to vector<160x96xf32>
    %c0_200 = arith.constant 0 : index
    %c0_201 = arith.constant 0 : index
    %218 = vector.load %arg3[%c0_200, %c0_201] : memref<96x96xf32, #tpu.memory_space<vmem>>, vector<96x96xf32>
    %cst = arith.constant dense<0.000000e+00> : vector<160x96xf32>
    %219 = tpu.matmul %217, %218, %cst {dimension_numbers = #tpu.dot_dimension_numbers<[1], [0], [0], [1], [0, 0, 1, 1], [], []>} : vector<160x96xf32>, vector<96x96xf32>, vector<160x96xf32> -> vector<160x96xf32>
    %220 = vector.shape_cast %219 : vector<160x96xf32> to vector<10x16x96xf32>
    %221 = vector.extract_strided_slice %220 {offsets = [0, 0, 0], sizes = [10, 16, 32], strides = [1, 1, 1]} : vector<10x16x96xf32> to vector<10x16x32xf32>
    %222 = vector.extract_strided_slice %220 {offsets = [0, 0, 32], sizes = [10, 16, 32], strides = [1, 1, 1]} : vector<10x16x96xf32> to vector<10x16x32xf32>
    %223 = vector.extract_strided_slice %220 {offsets = [0, 0, 64], sizes = [10, 16, 32], strides = [1, 1, 1]} : vector<10x16x96xf32> to vector<10x16x32xf32>
    %224 = vector.extract_strided_slice %221 {offsets = [0, 0, 0], sizes = [10, 1, 32], strides = [1, 1, 1]} : vector<10x16x32xf32> to vector<10x1x32xf32>
    %225 = vector.extract_strided_slice %221 {offsets = [0, 0, 0], sizes = [10, 15, 32], strides = [1, 1, 1]} : vector<10x16x32xf32> to vector<10x15x32xf32>
    %226 = tpu.concatenate %224, %225 in 1 : vector<10x1x32xf32>, vector<10x15x32xf32> -> vector<10x16x32xf32>
    %227 = vector.extract_strided_slice %223 {offsets = [0, 1, 0], sizes = [10, 15, 32], strides = [1, 1, 1]} : vector<10x16x32xf32> to vector<10x15x32xf32>
    %228 = vector.extract_strided_slice %223 {offsets = [0, 15, 0], sizes = [10, 1, 32], strides = [1, 1, 1]} : vector<10x16x32xf32> to vector<10x1x32xf32>
    %229 = tpu.concatenate %227, %228 in 1 : vector<10x15x32xf32>, vector<10x1x32xf32> -> vector<10x16x32xf32>
    %230 = arith.addf %226, %222 : vector<10x16x32xf32>
    %231 = arith.addf %230, %229 : vector<10x16x32xf32>
    %c0_202 = arith.constant 0 : index
    %c0_203 = arith.constant 0 : index
    %232 = vector.load %arg4[%c0_202, %c0_203] : memref<1x32xf32, #tpu.memory_space<vmem>>, vector<1x32xf32>
    %233 = vector.shape_cast %232 : vector<1x32xf32> to vector<1x1x32xf32>
    %234 = vector.broadcast %233 : vector<1x1x32xf32> to vector<10x16x32xf32>
    %235 = arith.addf %231, %234 : vector<10x16x32xf32>
    %cst_204 = arith.constant 0.000000e+00 : f32
    %236 = vector.broadcast %cst_204 : f32 to vector<10x16x32xf32>
    %237 = arith.cmpf oge, %235, %236 : vector<10x16x32xf32>
    %238 = vector.broadcast %0 : f32 to vector<10x16x32xf32>
    %239 = arith.mulf %238, %235 : vector<10x16x32xf32>
    %240 = arith.select %237, %235, %239 : vector<10x16x32xi1>, vector<10x16x32xf32>
    %241 = vector.extract_strided_slice %240 {offsets = [0, 0, 0], sizes = [8, 16, 32], strides = [1, 1, 1]} : vector<10x16x32xf32> to vector<8x16x32xf32>
    %242 = vector.extract_strided_slice %240 {offsets = [1, 0, 0], sizes = [8, 16, 32], strides = [1, 1, 1]} : vector<10x16x32xf32> to vector<8x16x32xf32>
    %243 = vector.extract_strided_slice %240 {offsets = [2, 0, 0], sizes = [8, 16, 32], strides = [1, 1, 1]} : vector<10x16x32xf32> to vector<8x16x32xf32>
    %244 = tpu.concatenate %241, %242, %243 in 2 : vector<8x16x32xf32>, vector<8x16x32xf32>, vector<8x16x32xf32> -> vector<8x16x96xf32>
    %245 = vector.shape_cast %244 : vector<8x16x96xf32> to vector<128x96xf32>
    %c0_205 = arith.constant 0 : index
    %c0_206 = arith.constant 0 : index
    %246 = vector.load %arg5[%c0_205, %c0_206] : memref<96x96xf32, #tpu.memory_space<vmem>>, vector<96x96xf32>
    %cst_207 = arith.constant dense<0.000000e+00> : vector<128x96xf32>
    %247 = tpu.matmul %245, %246, %cst_207 {dimension_numbers = #tpu.dot_dimension_numbers<[1], [0], [0], [1], [0, 0, 1, 1], [], []>} : vector<128x96xf32>, vector<96x96xf32>, vector<128x96xf32> -> vector<128x96xf32>
    %248 = vector.shape_cast %247 : vector<128x96xf32> to vector<8x16x96xf32>
    %249 = vector.extract_strided_slice %248 {offsets = [0, 0, 0], sizes = [8, 16, 32], strides = [1, 1, 1]} : vector<8x16x96xf32> to vector<8x16x32xf32>
    %250 = vector.extract_strided_slice %248 {offsets = [0, 0, 32], sizes = [8, 16, 32], strides = [1, 1, 1]} : vector<8x16x96xf32> to vector<8x16x32xf32>
    %251 = vector.extract_strided_slice %248 {offsets = [0, 0, 64], sizes = [8, 16, 32], strides = [1, 1, 1]} : vector<8x16x96xf32> to vector<8x16x32xf32>
    %252 = vector.extract_strided_slice %249 {offsets = [0, 0, 0], sizes = [8, 1, 32], strides = [1, 1, 1]} : vector<8x16x32xf32> to vector<8x1x32xf32>
    %253 = vector.extract_strided_slice %249 {offsets = [0, 0, 0], sizes = [8, 15, 32], strides = [1, 1, 1]} : vector<8x16x32xf32> to vector<8x15x32xf32>
    %254 = tpu.concatenate %252, %253 in 1 : vector<8x1x32xf32>, vector<8x15x32xf32> -> vector<8x16x32xf32>
    %255 = vector.extract_strided_slice %251 {offsets = [0, 1, 0], sizes = [8, 15, 32], strides = [1, 1, 1]} : vector<8x16x32xf32> to vector<8x15x32xf32>
    %256 = vector.extract_strided_slice %251 {offsets = [0, 15, 0], sizes = [8, 1, 32], strides = [1, 1, 1]} : vector<8x16x32xf32> to vector<8x1x32xf32>
    %257 = tpu.concatenate %255, %256 in 1 : vector<8x15x32xf32>, vector<8x1x32xf32> -> vector<8x16x32xf32>
    %258 = arith.addf %254, %250 : vector<8x16x32xf32>
    %259 = arith.addf %258, %257 : vector<8x16x32xf32>
    %c0_208 = arith.constant 0 : index
    %c0_209 = arith.constant 0 : index
    %260 = vector.load %arg6[%c0_208, %c0_209] : memref<1x32xf32, #tpu.memory_space<vmem>>, vector<1x32xf32>
    %261 = vector.shape_cast %260 : vector<1x32xf32> to vector<1x1x32xf32>
    %262 = vector.broadcast %261 : vector<1x1x32xf32> to vector<8x16x32xf32>
    %263 = arith.addf %259, %262 : vector<8x16x32xf32>
    %c0_210 = arith.constant 0 : index
    %264 = arith.index_cast %2 : i32 to index
    %c0_211 = arith.constant 0 : index
    %c0_212 = arith.constant 0 : index
    %265 = vector.load %arg2[%c0_210, %264, %c0_211, %c0_212] : memref<1x16x16x32xf32, #tpu.memory_space<vmem>>, vector<1x8x16x32xf32>
    %266 = vector.shape_cast %265 : vector<1x8x16x32xf32> to vector<8x16x32xf32>
    %267 = arith.addf %266, %263 : vector<8x16x32xf32>
    %cst_213 = arith.constant 0.000000e+00 : f32
    %268 = vector.broadcast %cst_213 : f32 to vector<8x16x32xf32>
    %269 = arith.cmpf oge, %267, %268 : vector<8x16x32xf32>
    %270 = vector.broadcast %0 : f32 to vector<8x16x32xf32>
    %271 = arith.mulf %270, %267 : vector<8x16x32xf32>
    %272 = arith.select %269, %267, %271 : vector<8x16x32xi1>, vector<8x16x32xf32>
    %c0_214 = arith.constant 0 : index
    %c0_215 = arith.constant 0 : index
    %c0_216 = arith.constant 0 : index
    %c0_217 = arith.constant 0 : index
    %273 = vector.load %arg8[%c0_214, %c0_215, %c0_216, %c0_217] : memref<1x8x16x32xf32, #tpu.memory_space<vmem>>, vector<1x8x16x32xf32>
    %274 = vector.shape_cast %273 : vector<1x8x16x32xf32> to vector<8x16x32xf32>
    %275 = vector.shape_cast %272 : vector<8x16x32xf32> to vector<1x8x16x32xf32>
    tpu.vector_store %arg8[%c0_214, %c0_215, %c0_216, %c0_217], %275 {strides = array<i32>} : memref<1x8x16x32xf32, #tpu.memory_space<vmem>>, vector<1x8x16x32xf32>,
    return
  }
  func.func @transform_0(%arg0: i32, %arg1: i32) -> (i32, i32, i32, i32) {
    %c0_i32 = arith.constant 0 : i32
    %c0_i32_0 = arith.constant 0 : i32
    %c0_i32_1 = arith.constant 0 : i32
    %c0_i32_2 = arith.constant 0 : i32
    return %arg0, %c0_i32, %c0_i32_0, %c0_i32_1 : i32, i32, i32, i32
  }
  func.func @transform_1(%arg0: i32, %arg1: i32) -> (i32, i32) {
    %c0_i32 = arith.constant 0 : i32
    %c0_i32_0 = arith.constant 0 : i32
    %c0_i32_1 = arith.constant 0 : i32
    return %c0_i32, %c0_i32_0 : i32, i32
  }
  func.func @transform_2(%arg0: i32, %arg1: i32) -> (i32, i32) {
    %c0_i32 = arith.constant 0 : i32
    %c0_i32_0 = arith.constant 0 : i32
    %c0_i32_1 = arith.constant 0 : i32
    return %c0_i32, %c0_i32_0 : i32, i32
  }
  func.func @transform_3(%arg0: i32, %arg1: i32) -> (i32, i32) {
    %c0_i32 = arith.constant 0 : i32
    %c0_i32_0 = arith.constant 0 : i32
    %c0_i32_1 = arith.constant 0 : i32
    return %c0_i32, %c0_i32_0 : i32, i32
  }
  func.func @transform_4(%arg0: i32, %arg1: i32) -> (i32, i32) {
    %c0_i32 = arith.constant 0 : i32
    %c0_i32_0 = arith.constant 0 : i32
    %c0_i32_1 = arith.constant 0 : i32
    return %c0_i32, %c0_i32_0 : i32, i32
  }
  func.func @transform_5(%arg0: i32, %arg1: i32) -> i32 {
    %c0_i32 = arith.constant 0 : i32
    %c0_i32_0 = arith.constant 0 : i32
    return %c0_i32 : i32
  }
  func.func @transform_6(%arg0: i32, %arg1: i32) -> (i32, i32, i32, i32) {
    %c0_i32 = arith.constant 0 : i32
    %c0_i32_0 = arith.constant 0 : i32
    %c0_i32_1 = arith.constant 0 : i32
    return %arg0, %arg1, %c0_i32, %c0_i32_0 : i32, i32, i32, i32
  }
}

</mosaic_0001>

<llo_original>
// kernel: tpu_custom_call.1
$region0: #{tpu_custom_call.1}
  #allocation0 [shape = 'u32[]', space=smem, size = 0x4, offset = 0x4, fixed_abs, tag = 'smem constant byte address 0x4 - core index']
  #allocation1 [shape = 'u32[144,128]{1,0:T(1,128)}', space=vmem, size = 0x12000, scoped, tag = 'internal scratch']
  #allocation2 [shape = 'f32[1]{0:T(128)S(6)}', space=smem, size = 0x200, scoped, tag = 'scoped memory for tpu_custom_call.1']
  %s0 = inlined_call_operand.hbm [shape: f32[2,16,16,32], index: 0, kind: input, shape index: {}]
  %s1 = inlined_call_operand.hbm [shape: f32[96,96], index: 1, kind: input, shape index: {}]
  %s2 = inlined_call_operand.vmem [shape: f32[1,32], index: 2, kind: input, shape index: {}]
  %s3 = inlined_call_operand.hbm [shape: f32[96,96], index: 3, kind: input, shape index: {}]
  %s4 = inlined_call_operand.vmem [shape: f32[1,32], index: 4, kind: input, shape index: {}]
  %s5 = inlined_call_operand.<no memory space> [shape: f32[1], index: 5, kind: input, shape index: {}]
  %s6 = inlined_call_operand.hbm [shape: f32[2,16,16,32], index: 6, kind: output, shape index: {}]
  %s7 = sld [smem:[#allocation0]]
  $region69: #{tpu_custom_call.1} parent=0
    _
  %s9 = ssub.s32 1, %s7
  %s10 = scalar_select 0, %s9, %s7
  %11 = sst [smem:[#allocation2]] %s5
  $region1: #{tpu_custom_call.1} parent=0
    #allocation3 [shape = 'u8[262144]{0}', space=vmem, size = 0x40000, scoped, tag = 'input window, operand 0']
    #allocation4 [shape = 's32[2]{0}', space=sflag, size = 0x8, scoped, tag = 'scoped memory for tpu_custom_call.1']
    #allocation5 [shape = 's32[2]{0}', space=sflag, size = 0x8, scoped, tag = 'scoped memory for tpu_custom_call.1']
    #allocation6 [shape = 'u8[49152]{0}', space=vmem, size = 0xc000, scoped, tag = 'input window, operand 1, single buffered']
    #allocation7 [shape = 's32[1]{0}', space=sflag, size = 0x4, scoped, tag = 'scoped memory for tpu_custom_call.1']
    #allocation8 [shape = 'u8[49152]{0}', space=vmem, size = 0xc000, scoped, tag = 'input window, operand 3, single buffered']
    #allocation9 [shape = 'u8[131072]{0}', space=vmem, size = 0x20000, scoped, tag = 'output window, operand 0']
    %12 = vsyncpa [#allocation4], 0
    %s13 = scalar_lea.sflag [#allocation4], 1
    %14 = vsyncpa %s13, 0
    %15 = vsyncpa [#allocation7], 0
    %16 = vsyncpa [#allocation5], 0
    %s17 = scalar_lea.sflag [#allocation5], 1
    %18 = vsyncpa %s17, 0
    loop: start=0, step=1, limit=6
    $region2: #{tpu_custom_call.1} parent=1 // loop_pre_header
      _
    $region3: #{tpu_custom_call.1} parent=1 // loop_header
      %s20 = sphi 0, %s24
      %p21 = scmp.ge.s32.totalorder %s20, 6
      %s27 = sphi 0, %s39
      %s28 = sphi 0, %s35
      %s29 = sphi 0, %s27
      %s30 = sphi 0, %s28
      %s31 = sphi 0, %s29
      %s32 = sphi 0, %s30
      %s42 = sphi 0, %s44
      %s45 = sphi 0, %s42
      %s46 = sphi 0, %s45
      %s62 = sphi 0, %s46
      %s66 = sphi 0, %s66
      %s68 = sphi 0, %s66
      %s69 = sphi 0, %s68
      %s83 = sphi 0, %s69
      %s87 = sphi 0, %s87
      %s89 = sphi 0, %s87
      %s90 = sphi 0, %s89
      %s104 = sphi 0, %s90
      %s108 = sphi 0, %s108
      %s110 = sphi 0, %s108
      %s111 = sphi 0, %s110
      %s125 = sphi 0, %s111
      %s129 = sphi 0, %s129
      %s131 = sphi 0, %s129
      %s132 = sphi 0, %s131
      %s146 = sphi 0, %s132
      %s150 = sphi 0, %s150
      %s152 = sphi 0, %s150
      %s153 = sphi 0, %s152
      %s167 = sphi 0, %s153
      %s175 = sphi 0, %s177
      %s178 = sphi 0, %s175
      %s179 = sphi 0, %s178
      %s195 = sphi 0, %s179
    $region4: #{tpu_custom_call.1} parent=1 // loop_header_branch
      %23 = sbr.rel (%p21) target = $region8
    $region5: #{tpu_custom_call.1} parent=1 // loop_body
      %s25 = ssub.s32 %s20, 1
      %s26 = ssub.s32 %s20, 2
      %s33 = sadd.s32 1, %s28
      %p34 = scmp.ge.s32.totalorder %s33, 2
      %s35 = scalar_select %p34, 0, %s33
      %s36 = sadd.s32 1, %s27
      %s37 = scalar_select %p34, %s36, %s27
      %p38 = scmp.ge.s32.totalorder %s37, 2
      %s39 = scalar_select %p38, 0, %s37
      %s40 = ssub.s32 %s27, %s39
      %p41 = scmp.eq.s32.totalorder %s40, 0
      %s43 = sadd.s32 %s42, 1
      %s44 = scalar_select %p41, %s42, %s43
      %p47 = pneg %p41
      %p48 = scmp.eq.s32.totalorder %s20, 3
      %p49 = por %p47, %p48
      %p50 = scmp.ne.s32.totalorder %s42, %s45
      %p51 = scmp.eq.s32.totalorder %s20, 0
      %p52 = por %p50, %p51
      %p53 = scmp.ne.s32.totalorder %s42, %s45
      %p54 = scmp.eq.s32.totalorder %s25, 3
      %p55 = por %p53, %p54
      %p56 = scmp.ne.s32.totalorder %s45, %s46
      %p57 = scmp.eq.s32.totalorder %s25, 0
      %p58 = por %p56, %p57
      %p59 = scmp.ne.s32.totalorder %s45, %s46
      %p60 = scmp.eq.s32.totalorder %s26, 3
      %p61 = por %p59, %p60
      %p63 = scmp.ne.s32.totalorder %s46, %s62
      %p64 = scmp.eq.s32.totalorder %s26, 0
      %p65 = por %p63, %p64
      %s67 = sadd.s32 %s66, 1
      %p70 = scmp.eq.s32.totalorder %s20, 3
      %p71 = scmp.ne.s32.totalorder %s66, %s68
      %p72 = scmp.eq.s32.totalorder %s20, 0
      %p73 = por %p71, %p72
      %p74 = scmp.ne.s32.totalorder %s66, %s68
      %p75 = scmp.eq.s32.totalorder %s25, 3
      %p76 = por %p74, %p75
      %p77 = scmp.ne.s32.totalorder %s68, %s69
      %p78 = scmp.eq.s32.totalorder %s25, 0
      %p79 = por %p77, %p78
      %p80 = scmp.ne.s32.totalorder %s68, %s69
      %p81 = scmp.eq.s32.totalorder %s26, 3
      %p82 = por %p80, %p81
      %p84 = scmp.ne.s32.totalorder %s69, %s83
      %p85 = scmp.eq.s32.totalorder %s26, 0
      %p86 = por %p84, %p85
      %s88 = sadd.s32 %s87, 1
      %p91 = scmp.eq.s32.totalorder %s20, 3
      %p92 = scmp.ne.s32.totalorder %s87, %s89
      %p93 = scmp.eq.s32.totalorder %s20, 0
      %p94 = por %p92, %p93
      %p95 = scmp.ne.s32.totalorder %s87, %s89
      %p96 = scmp.eq.s32.totalorder %s25, 3
      %p97 = por %p95, %p96
      %p98 = scmp.ne.s32.totalorder %s89, %s90
      %p99 = scmp.eq.s32.totalorder %s25, 0
      %p100 = por %p98, %p99
      %p101 = scmp.ne.s32.totalorder %s89, %s90
      %p102 = scmp.eq.s32.totalorder %s26, 3
      %p103 = por %p101, %p102
      %p105 = scmp.ne.s32.totalorder %s90, %s104
      %p106 = scmp.eq.s32.totalorder %s26, 0
      %p107 = por %p105, %p106
      %s109 = sadd.s32 %s108, 1
      %p112 = scmp.eq.s32.totalorder %s20, 3
      %p113 = scmp.ne.s32.totalorder %s108, %s110
      %p114 = scmp.eq.s32.totalorder %s20, 0
      %p115 = por %p113, %p114
      %p116 = scmp.ne.s32.totalorder %s108, %s110
      %p117 = scmp.eq.s32.totalorder %s25, 3
      %p118 = por %p116, %p117
      %p119 = scmp.ne.s32.totalorder %s110, %s111
      %p120 = scmp.eq.s32.totalorder %s25, 0
      %p121 = por %p119, %p120
      %p122 = scmp.ne.s32.totalorder %s110, %s111
      %p123 = scmp.eq.s32.totalorder %s26, 3
      %p124 = por %p122, %p123
      %p126 = scmp.ne.s32.totalorder %s111, %s125
      %p127 = scmp.eq.s32.totalorder %s26, 0
      %p128 = por %p126, %p127
      %s130 = sadd.s32 %s129, 1
      %p133 = scmp.eq.s32.totalorder %s20, 3
      %p134 = scmp.ne.s32.totalorder %s129, %s131
      %p135 = scmp.eq.s32.totalorder %s20, 0
      %p136 = por %p134, %p135
      %p137 = scmp.ne.s32.totalorder %s129, %s131
      %p138 = scmp.eq.s32.totalorder %s25, 3
      %p139 = por %p137, %p138
      %p140 = scmp.ne.s32.totalorder %s131, %s132
      %p141 = scmp.eq.s32.totalorder %s25, 0
      %p142 = por %p140, %p141
      %p143 = scmp.ne.s32.totalorder %s131, %s132
      %p144 = scmp.eq.s32.totalorder %s26, 3
      %p145 = por %p143, %p144
      %p147 = scmp.ne.s32.totalorder %s132, %s146
      %p148 = scmp.eq.s32.totalorder %s26, 0
      %p149 = por %p147, %p148
      %s151 = sadd.s32 %s150, 1
      %p154 = scmp.eq.s32.totalorder %s20, 3
      %p155 = scmp.ne.s32.totalorder %s150, %s152
      %p156 = scmp.eq.s32.totalorder %s20, 0
      %p157 = por %p155, %p156
      %p158 = scmp.ne.s32.totalorder %s150, %s152
      %p159 = scmp.eq.s32.totalorder %s25, 3
      %p160 = por %p158, %p159
      %p161 = scmp.ne.s32.totalorder %s152, %s153
      %p162 = scmp.eq.s32.totalorder %s25, 0
      %p163 = por %p161, %p162
      %p164 = scmp.ne.s32.totalorder %s152, %s153
      %p165 = scmp.eq.s32.totalorder %s26, 3
      %p166 = por %p164, %p165
      %p168 = scmp.ne.s32.totalorder %s153, %s167
      %p169 = scmp.eq.s32.totalorder %s26, 0
      %p170 = por %p168, %p169
      %s171 = ssub.s32 %s27, %s39
      %s172 = ssub.s32 %s28, %s35
      %s173 = sor.u32 %s171, %s172
      %p174 = scmp.eq.s32.totalorder %s173, 0
      %s176 = sadd.s32 %s175, 1
      %s177 = scalar_select %p174, %s175, %s176
      %p180 = pneg %p174
      %p181 = scmp.eq.s32.totalorder %s20, 3
      %p182 = por %p180, %p181
      %p183 = scmp.ne.s32.totalorder %s175, %s178
      %p184 = scmp.eq.s32.totalorder %s20, 0
      %p185 = por %p183, %p184
      %p186 = scmp.ne.s32.totalorder %s175, %s178
      %p187 = scmp.eq.s32.totalorder %s25, 3
      %p188 = por %p186, %p187
      %p189 = scmp.ne.s32.totalorder %s178, %s179
      %p190 = scmp.eq.s32.totalorder %s25, 0
      %p191 = por %p189, %p190
      %p192 = scmp.ne.s32.totalorder %s178, %s179
      %p193 = scmp.eq.s32.totalorder %s26, 3
      %p194 = por %p192, %p193
      %p196 = scmp.ne.s32.totalorder %s179, %s195
      %p197 = scmp.eq.s32.totalorder %s26, 0
      %p198 = por %p196, %p197
      %p199 = scmp.le.s32.totalorder 1, %s20
      %p200 = scmp.lt.s32.totalorder %s20, 5
      %p201 = pnand %p199, %p200
      %p202 = pneg %p201
      // Predicated region
      $region9: #{tpu_custom_call.1} parent=5 // pred_check
        _
      $region10: #{tpu_custom_call.1} parent=5 // pred_check_branch
        %204 = sbr.rel (%p201) target = $region12
      $region11: #{tpu_custom_call.1} parent=5 // pred_region
        %s205 = ssub.s32 %s20, 1
        // Predicated region
        $region13: #{tpu_custom_call.1} parent=11 // pred_check
          %p206 = pneg %p79
        $region14: #{tpu_custom_call.1} parent=11 // pred_check_branch
          %208 = sbr.rel (%p206) target = $region16
        $region15: #{tpu_custom_call.1} parent=11 // pred_region
          %s210 = ssub.s32 1536, 1536
          %211 = vsyncadd [#allocation7], %s210
          %s212 = sshll.u32 [#allocation6], 4
          %s213 = int_to_ptr.vmem [resolvable:$true] %s212
          %218 = dma.hbm_to_vmem [thread:$0]  %s1, 1536, %s213, [#allocation7], 128, 128, 8
        $region16: #{tpu_custom_call.1} parent=11 // pred_fallthru
          _
        // Predicated region
        $region17: #{tpu_custom_call.1} parent=11 // pred_check
          %p219 = pneg %p100
        $region18: #{tpu_custom_call.1} parent=11 // pred_check_branch
          %221 = sbr.rel (%p219) target = $region20
        $region19: #{tpu_custom_call.1} parent=11 // pred_region
          _
        $region20: #{tpu_custom_call.1} parent=11 // pred_fallthru
          _
        // Predicated region
        $region21: #{tpu_custom_call.1} parent=11 // pred_check
          %p222 = pneg %p121
        $region22: #{tpu_custom_call.1} parent=11 // pred_check_branch
          %224 = sbr.rel (%p222) target = $region24
        $region23: #{tpu_custom_call.1} parent=11 // pred_region
          %s226 = ssub.s32 1536, 1536
          %227 = vsyncadd [#allocation7], %s226
          %s228 = sshll.u32 [#allocation8], 4
          %s229 = int_to_ptr.vmem [resolvable:$true] %s228
          %234 = dma.hbm_to_vmem [thread:$0]  %s3, 1536, %s229, [#allocation7], 128, 128, 8
        $region24: #{tpu_custom_call.1} parent=11 // pred_fallthru
          _
        // Predicated region
        $region25: #{tpu_custom_call.1} parent=11 // pred_check
          %p235 = pneg %p142
        $region26: #{tpu_custom_call.1} parent=11 // pred_check_branch
          %237 = sbr.rel (%p235) target = $region28
        $region27: #{tpu_custom_call.1} parent=11 // pred_region
          _
        $region28: #{tpu_custom_call.1} parent=11 // pred_fallthru
          _
        // Predicated region
        $region29: #{tpu_custom_call.1} parent=11 // pred_check
          %p238 = pneg %p163
        $region30: #{tpu_custom_call.1} parent=11 // pred_check_branch
          %240 = sbr.rel (%p238) target = $region32
        $region31: #{tpu_custom_call.1} parent=11 // pred_region
          _
        $region32: #{tpu_custom_call.1} parent=11 // pred_fallthru
          _
      $region12: #{tpu_custom_call.1} parent=5 // pred_fallthru
        _
      %p241 = scmp.lt.s32.totalorder %s20, 4
      // Predicated region
      $region33: #{tpu_custom_call.1} parent=5 // pred_check
        %p242 = pneg %p241
      $region34: #{tpu_custom_call.1} parent=5 // pred_check_branch
        %244 = sbr.rel (%p242) target = $region36
      $region35: #{tpu_custom_call.1} parent=5 // pred_region
        // Predicated region
        $region37: #{tpu_custom_call.1} parent=35 // pred_check
          %p245 = pneg %p52
        $region38: #{tpu_custom_call.1} parent=35 // pred_check_branch
          %247 = sbr.rel (%p245) target = $region40
        $region39: #{tpu_custom_call.1} parent=35 // pred_region
          %s248 = sand.u32 %s42, 1
          %s249 = scalar_lea.sflag [#allocation4], %s248
          %s250 = sand.u32 %s42, 1
          %s251 = smul.addr %s250, 256
          %s252 = scalar_lea.vmem [#allocation3], %s251
          %s254 = ssub.s32 4096, 4096
          %255 = vsyncadd %s249, %s254
          %s256 = smul.addr %s27, 32
          %s257 = smul.addr %s256, 128
          %s258 = scalar_lea.hbm %s0, %s257
          %s259 = sshll.u32 %s252, 4
          %s260 = int_to_ptr.vmem [resolvable:$true] %s259
          %265 = dma.hbm_to_vmem [thread:$0]  %s258, 4096, %s260, %s249, 128, 128, 8
        $region40: #{tpu_custom_call.1} parent=35 // pred_fallthru
          _
      $region36: #{tpu_custom_call.1} parent=5 // pred_fallthru
        _
      %p266 = scmp.le.s32.totalorder 1, %s20
      %p267 = scmp.lt.s32.totalorder %s20, 5
      %p268 = pnand %p266, %p267
      %p269 = pneg %p268
      // Predicated region
      $region41: #{tpu_custom_call.1} parent=5 // pred_check
        _
      $region42: #{tpu_custom_call.1} parent=5 // pred_check_branch
        %271 = sbr.rel (%p268) target = $region44
      $region43: #{tpu_custom_call.1} parent=5 // pred_region
        %s272 = ssub.s32 %s20, 1
        %s273 = sand.u32 %s45, 1
        %s274 = scalar_lea.sflag [#allocation4], %s273
        %s275 = sand.u32 %s45, 1
        %s276 = smul.addr %s275, 256
        %s277 = scalar_lea.vmem [#allocation3], %s276
        // Predicated region
        $region45: #{tpu_custom_call.1} parent=43 // pred_check
          %p278 = pneg %p58
        $region46: #{tpu_custom_call.1} parent=43 // pred_check_branch
          %280 = sbr.rel (%p278) target = $region48
        $region47: #{tpu_custom_call.1} parent=43 // pred_region
          %281 = dma.done %s274, 4096
        $region48: #{tpu_custom_call.1} parent=43 // pred_fallthru
          _
        // Predicated region
        $region49: #{tpu_custom_call.1} parent=43 // pred_check
          %p282 = pneg %p79
        $region50: #{tpu_custom_call.1} parent=43 // pred_check_branch
          %284 = sbr.rel (%p282) target = $region52
        $region51: #{tpu_custom_call.1} parent=43 // pred_region
          %285 = dma.done [#allocation7], 1536
        $region52: #{tpu_custom_call.1} parent=43 // pred_fallthru
          _
        // Predicated region
        $region53: #{tpu_custom_call.1} parent=43 // pred_check
          %p286 = pneg %p121
        $region54: #{tpu_custom_call.1} parent=43 // pred_check_branch
          %288 = sbr.rel (%p286) target = $region56
        $region55: #{tpu_custom_call.1} parent=43 // pred_region
          %289 = dma.done [#allocation7], 1536
        $region56: #{tpu_custom_call.1} parent=43 // pred_fallthru
          _
        %s290 = sand.u32 %s45, 1
        %s291 = scalar_lea.sflag [#allocation4], %s290
        %s292 = sand.u32 %s45, 1
        %s293 = smul.addr %s292, 256
        %s294 = scalar_lea.vmem [#allocation3], %s293
        %p295 = pneg %p58
        %p296 = pneg %p55
        %p297 = pneg %p79
        %p298 = pneg %p76
        %p299 = pneg %p100
        %p300 = pneg %p97
        %p301 = pneg %p121
        %p302 = pneg %p118
        %p303 = pneg %p142
        %p304 = pneg %p139
        %p305 = pneg %p163
        %p306 = pneg %p160
        %p307 = pneg %p191
        %p308 = pneg %p188
        %s309 = sand.u32 %s178, 1
        %s310 = scalar_lea.sflag [#allocation5], %s309
        %s311 = sand.u32 %s178, 1
        %s312 = smul.addr %s311, 128
        %s313 = scalar_lea.vmem [#allocation9], %s312
        %s314 = smul.u32 8, %s30
        %s315 = sld [smem:[#allocation2]]
        %s316 = smul.u32 %s30, 8
        %s317 = ssub.s32 %s316, 1
        %p318 = scmp.gt.s32.totalorder %s317, 0
        %s319 = scalar_select %p318, %s317, 0
        %p320 = scmp.lt.s32.totalorder %s319, 15
        %s321 = scalar_select %p320, %s319, 15
        %s322 = ssub.s32 %s321, 1
        %p323 = scmp.gt.s32.totalorder %s322, 0
        %s324 = scalar_select %p323, %s322, 0
        %p325 = scmp.lt.s32.totalorder %s324, 15
        %s326 = scalar_select %p325, %s324, 15
        %s327 = smul.u32 %s326, 16
        %s328 = scalar_lea.vmem %s277, %s327 [#allocation3]
        %v329 = vld [vmem:[%s328] sm:$0xff]
        %v330 = vld [vmem:[%s328 + $0x8] sm:$0xff]
        %p331 = scmp.gt.s32.totalorder %s321, 0
        %s332 = scalar_select %p331, %s321, 0
        %p333 = scmp.lt.s32.totalorder %s332, 15
        %s334 = scalar_select %p333, %s332, 15
        %s335 = smul.u32 %s334, 16
        %s336 = scalar_lea.vmem %s277, %s335 [#allocation3]
        %v337 = vld [vmem:[%s336] sm:$0xff]
        %v338 = vld [vmem:[%s336 + $0x8] sm:$0xff]
        %s339 = sadd.s32 %s321, 1
        %p340 = scmp.gt.s32.totalorder %s339, 0
        %s341 = scalar_select %p340, %s339, 0
        %p342 = scmp.lt.s32.totalorder %s341, 15
        %s343 = scalar_select %p342, %s341, 15
        %s344 = smul.u32 %s343, 16
        %s345 = scalar_lea.vmem %s277, %s344 [#allocation3]
        %v346 = vld [vmem:[%s345] sm:$0xff]
        %v347 = vld [vmem:[%s345 + $0x8] sm:$0xff]
        %p348 = scmp.gt.s32.totalorder %s316, 0
        %s349 = scalar_select %p348, %s316, 0
        %p350 = scmp.lt.s32.totalorder %s349, 15
        %s351 = scalar_select %p350, %s349, 15
        %s352 = ssub.s32 %s351, 1
        %p353 = scmp.gt.s32.totalorder %s352, 0
        %s354 = scalar_select %p353, %s352, 0
        %p355 = scmp.lt.s32.totalorder %s354, 15
        %s356 = scalar_select %p355, %s354, 15
        %s357 = smul.u32 %s356, 16
        %s358 = scalar_lea.vmem %s277, %s357 [#allocation3]
        %v359 = vld [vmem:[%s358] sm:$0xff]
        %v360 = vld [vmem:[%s358 + $0x8] sm:$0xff]
        %p361 = scmp.gt.s32.totalorder %s351, 0
        %s362 = scalar_select %p361, %s351, 0
        %p363 = scmp.lt.s32.totalorder %s362, 15
        %s364 = scalar_select %p363, %s362, 15
        %s365 = smul.u32 %s364, 16
        %s366 = scalar_lea.vmem %s277, %s365 [#allocation3]
        %v367 = vld [vmem:[%s366] sm:$0xff]
        %v368 = vld [vmem:[%s366 + $0x8] sm:$0xff]
        %s369 = sadd.s32 %s351, 1
        %p370 = scmp.gt.s32.totalorder %s369, 0
        %s371 = scalar_select %p370, %s369, 0
        %p372 = scmp.lt.s32.totalorder %s371, 15
        %s373 = scalar_select %p372, %s371, 15
        %s374 = smul.u32 %s373, 16
        %s375 = scalar_lea.vmem %s277, %s374 [#allocation3]
        %v376 = vld [vmem:[%s375] sm:$0xff]
        %v377 = vld [vmem:[%s375 + $0x8] sm:$0xff]
        %s378 = sadd.s32 %s316, 1
        %p379 = scmp.gt.s32.totalorder %s378, 0
        %s380 = scalar_select %p379, %s378, 0
        %p381 = scmp.lt.s32.totalorder %s380, 15
        %s382 = scalar_select %p381, %s380, 15
        %s383 = ssub.s32 %s382, 1
        %p384 = scmp.gt.s32.totalorder %s383, 0
        %s385 = scalar_select %p384, %s383, 0
        %p386 = scmp.lt.s32.totalorder %s385, 15
        %s387 = scalar_select %p386, %s385, 15
        %s388 = smul.u32 %s387, 16
        %s389 = scalar_lea.vmem %s277, %s388 [#allocation3]
        %v390 = vld [vmem:[%s389] sm:$0xff]
        %v391 = vld [vmem:[%s389 + $0x8] sm:$0xff]
        %p392 = scmp.gt.s32.totalorder %s382, 0
        %s393 = scalar_select %p392, %s382, 0
        %p394 = scmp.lt.s32.totalorder %s393, 15
        %s395 = scalar_select %p394, %s393, 15
        %s396 = smul.u32 %s395, 16
        %s397 = scalar_lea.vmem %s277, %s396 [#allocation3]
        %v398 = vld [vmem:[%s397] sm:$0xff]
        %v399 = vld [vmem:[%s397 + $0x8] sm:$0xff]
        %s400 = sadd.s32 %s382, 1
        %p401 = scmp.gt.s32.totalorder %s400, 0
        %s402 = scalar_select %p401, %s400, 0
        %p403 = scmp.lt.s32.totalorder %s402, 15
        %s404 = scalar_select %p403, %s402, 15
        %s405 = smul.u32 %s404, 16
        %s406 = scalar_lea.vmem %s277, %s405 [#allocation3]
        %v407 = vld [vmem:[%s406] sm:$0xff]
        %v408 = vld [vmem:[%s406 + $0x8] sm:$0xff]
        %s409 = sadd.s32 %s316, 2
        %p410 = scmp.gt.s32.totalorder %s409, 0
        %s411 = scalar_select %p410, %s409, 0
        %p412 = scmp.lt.s32.totalorder %s411, 15
        %s413 = scalar_select %p412, %s411, 15
        %s414 = ssub.s32 %s413, 1
        %p415 = scmp.gt.s32.totalorder %s414, 0
        %s416 = scalar_select %p415, %s414, 0
        %p417 = scmp.lt.s32.totalorder %s416, 15
        %s418 = scalar_select %p417, %s416, 15
        %s419 = smul.u32 %s418, 16
        %s420 = scalar_lea.vmem %s277, %s419 [#allocation3]
        %v421 = vld [vmem:[%s420] sm:$0xff]
        %v422 = vld [vmem:[%s420 + $0x8] sm:$0xff]
        %p423 = scmp.gt.s32.totalorder %s413, 0
        %s424 = scalar_select %p423, %s413, 0
        %p425 = scmp.lt.s32.totalorder %s424, 15
        %s426 = scalar_select %p425, %s424, 15
        %s427 = smul.u32 %s426, 16
        %s428 = scalar_lea.vmem %s277, %s427 [#allocation3]
        %v429 = vld [vmem:[%s428] sm:$0xff]
        %v430 = vld [vmem:[%s428 + $0x8] sm:$0xff]
        %s431 = sadd.s32 %s413, 1
        %p432 = scmp.gt.s32.totalorder %s431, 0
        %s433 = scalar_select %p432, %s431, 0
        %p434 = scmp.lt.s32.totalorder %s433, 15
        %s435 = scalar_select %p434, %s433, 15
        %s436 = smul.u32 %s435, 16
        %s437 = scalar_lea.vmem %s277, %s436 [#allocation3]
        %v438 = vld [vmem:[%s437] sm:$0xff]
        %v439 = vld [vmem:[%s437 + $0x8] sm:$0xff]
        %s440 = sadd.s32 %s316, 3
        %p441 = scmp.gt.s32.totalorder %s440, 0
        %s442 = scalar_select %p441, %s440, 0
        %p443 = scmp.lt.s32.totalorder %s442, 15
        %s444 = scalar_select %p443, %s442, 15
        %s445 = ssub.s32 %s444, 1
        %p446 = scmp.gt.s32.totalorder %s445, 0
        %s447 = scalar_select %p446, %s445, 0
        %p448 = scmp.lt.s32.totalorder %s447, 15
        %s449 = scalar_select %p448, %s447, 15
        %s450 = smul.u32 %s449, 16
        %s451 = scalar_lea.vmem %s277, %s450 [#allocation3]
        %v452 = vld [vmem:[%s451] sm:$0xff]
        %v453 = vld [vmem:[%s451 + $0x8] sm:$0xff]
        %p454 = scmp.gt.s32.totalorder %s444, 0
        %s455 = scalar_select %p454, %s444, 0
        %p456 = scmp.lt.s32.totalorder %s455, 15
        %s457 = scalar_select %p456, %s455, 15
        %s458 = smul.u32 %s457, 16
        %s459 = scalar_lea.vmem %s277, %s458 [#allocation3]
        %v460 = vld [vmem:[%s459] sm:$0xff]
        %v461 = vld [vmem:[%s459 + $0x8] sm:$0xff]
        %s462 = sadd.s32 %s444, 1
        %p463 = scmp.gt.s32.totalorder %s462, 0
        %s464 = scalar_select %p463, %s462, 0
        %p465 = scmp.lt.s32.totalorder %s464, 15
        %s466 = scalar_select %p465, %s464, 15
        %s467 = smul.u32 %s466, 16
        %s468 = scalar_lea.vmem %s277, %s467 [#allocation3]
        %v469 = vld [vmem:[%s468] sm:$0xff]
        %v470 = vld [vmem:[%s468 + $0x8] sm:$0xff]
        %s471 = sadd.s32 %s316, 4
        %p472 = scmp.gt.s32.totalorder %s471, 0
        %s473 = scalar_select %p472, %s471, 0
        %p474 = scmp.lt.s32.totalorder %s473, 15
        %s475 = scalar_select %p474, %s473, 15
        %s476 = ssub.s32 %s475, 1
        %p477 = scmp.gt.s32.totalorder %s476, 0
        %s478 = scalar_select %p477, %s476, 0
        %p479 = scmp.lt.s32.totalorder %s478, 15
        %s480 = scalar_select %p479, %s478, 15
        %s481 = smul.u32 %s480, 16
        %s482 = scalar_lea.vmem %s277, %s481 [#allocation3]
        %v483 = vld [vmem:[%s482] sm:$0xff]
        %v484 = vld [vmem:[%s482 + $0x8] sm:$0xff]
        %p485 = scmp.gt.s32.totalorder %s475, 0
        %s486 = scalar_select %p485, %s475, 0
        %p487 = scmp.lt.s32.totalorder %s486, 15
        %s488 = scalar_select %p487, %s486, 15
        %s489 = smul.u32 %s488, 16
        %s490 = scalar_lea.vmem %s277, %s489 [#allocation3]
        %v491 = vld [vmem:[%s490] sm:$0xff]
        %v492 = vld [vmem:[%s490 + $0x8] sm:$0xff]
        %s493 = sadd.s32 %s475, 1
        %p494 = scmp.gt.s32.totalorder %s493, 0
        %s495 = scalar_select %p494, %s493, 0
        %p496 = scmp.lt.s32.totalorder %s495, 15
        %s497 = scalar_select %p496, %s495, 15
        %s498 = smul.u32 %s497, 16
        %s499 = scalar_lea.vmem %s277, %s498 [#allocation3]
        %v500 = vld [vmem:[%s499] sm:$0xff]
        %v501 = vld [vmem:[%s499 + $0x8] sm:$0xff]
        %s502 = sadd.s32 %s316, 5
        %p503 = scmp.gt.s32.totalorder %s502, 0
        %s504 = scalar_select %p503, %s502, 0
        %p505 = scmp.lt.s32.totalorder %s504, 15
        %s506 = scalar_select %p505, %s504, 15
        %s507 = ssub.s32 %s506, 1
        %p508 = scmp.gt.s32.totalorder %s507, 0
        %s509 = scalar_select %p508, %s507, 0
        %p510 = scmp.lt.s32.totalorder %s509, 15
        %s511 = scalar_select %p510, %s509, 15
        %s512 = smul.u32 %s511, 16
        %s513 = scalar_lea.vmem %s277, %s512 [#allocation3]
        %v514 = vld [vmem:[%s513] sm:$0xff]
        %v515 = vld [vmem:[%s513 + $0x8] sm:$0xff]
        %p516 = scmp.gt.s32.totalorder %s506, 0
        %s517 = scalar_select %p516, %s506, 0
        %p518 = scmp.lt.s32.totalorder %s517, 15
        %s519 = scalar_select %p518, %s517, 15
        %s520 = smul.u32 %s519, 16
        %s521 = scalar_lea.vmem %s277, %s520 [#allocation3]
        %v522 = vld [vmem:[%s521] sm:$0xff]
        %v523 = vld [vmem:[%s521 + $0x8] sm:$0xff]
        %s524 = sadd.s32 %s506, 1
        %p525 = scmp.gt.s32.totalorder %s524, 0
        %s526 = scalar_select %p525, %s524, 0
        %p527 = scmp.lt.s32.totalorder %s526, 15
        %s528 = scalar_select %p527, %s526, 15
        %s529 = smul.u32 %s528, 16
        %s530 = scalar_lea.vmem %s277, %s529 [#allocation3]
        %v531 = vld [vmem:[%s530] sm:$0xff]
        %v532 = vld [vmem:[%s530 + $0x8] sm:$0xff]
        %s533 = sadd.s32 %s316, 6
        %p534 = scmp.gt.s32.totalorder %s533, 0
        %s535 = scalar_select %p534, %s533, 0
        %p536 = scmp.lt.s32.totalorder %s535, 15
        %s537 = scalar_select %p536, %s535, 15
        %s538 = ssub.s32 %s537, 1
        %p539 = scmp.gt.s32.totalorder %s538, 0
        %s540 = scalar_select %p539, %s538, 0
        %p541 = scmp.lt.s32.totalorder %s540, 15
        %s542 = scalar_select %p541, %s540, 15
        %s543 = smul.u32 %s542, 16
        %s544 = scalar_lea.vmem %s277, %s543 [#allocation3]
        %v545 = vld [vmem:[%s544] sm:$0xff]
        %v546 = vld [vmem:[%s544 + $0x8] sm:$0xff]
        %p547 = scmp.gt.s32.totalorder %s537, 0
        %s548 = scalar_select %p547, %s537, 0
        %p549 = scmp.lt.s32.totalorder %s548, 15
        %s550 = scalar_select %p549, %s548, 15
        %s551 = smul.u32 %s550, 16
        %s552 = scalar_lea.vmem %s277, %s551 [#allocation3]
        %v553 = vld [vmem:[%s552] sm:$0xff]
        %v554 = vld [vmem:[%s552 + $0x8] sm:$0xff]
        %s555 = sadd.s32 %s537, 1
        %p556 = scmp.gt.s32.totalorder %s555, 0
        %s557 = scalar_select %p556, %s555, 0
        %p558 = scmp.lt.s32.totalorder %s557, 15
        %s559 = scalar_select %p558, %s557, 15
        %s560 = smul.u32 %s559, 16
        %s561 = scalar_lea.vmem %s277, %s560 [#allocation3]
        %v562 = vld [vmem:[%s561] sm:$0xff]
        %v563 = vld [vmem:[%s561 + $0x8] sm:$0xff]
        %s564 = sadd.s32 %s316, 7
        %p565 = scmp.gt.s32.totalorder %s564, 0
        %s566 = scalar_select %p565, %s564, 0
        %p567 = scmp.lt.s32.totalorder %s566, 15
        %s568 = scalar_select %p567, %s566, 15
        %s569 = ssub.s32 %s568, 1
        %p570 = scmp.gt.s32.totalorder %s569, 0
        %s571 = scalar_select %p570, %s569, 0
        %p572 = scmp.lt.s32.totalorder %s571, 15
        %s573 = scalar_select %p572, %s571, 15
        %s574 = smul.u32 %s573, 16
        %s575 = scalar_lea.vmem %s277, %s574 [#allocation3]
        %v576 = vld [vmem:[%s575] sm:$0xff]
        %v577 = vld [vmem:[%s575 + $0x8] sm:$0xff]
        %p578 = scmp.gt.s32.totalorder %s568, 0
        %s579 = scalar_select %p578, %s568, 0
        %p580 = scmp.lt.s32.totalorder %s579, 15
        %s581 = scalar_select %p580, %s579, 15
        %s582 = smul.u32 %s581, 16
        %s583 = scalar_lea.vmem %s277, %s582 [#allocation3]
        %v584 = vld [vmem:[%s583] sm:$0xff]
        %v585 = vld [vmem:[%s583 + $0x8] sm:$0xff]
        %s586 = sadd.s32 %s568, 1
        %p587 = scmp.gt.s32.totalorder %s586, 0
        %s588 = scalar_select %p587, %s586, 0
        %p589 = scmp.lt.s32.totalorder %s588, 15
        %s590 = scalar_select %p589, %s588, 15
        %s591 = smul.u32 %s590, 16
        %s592 = scalar_lea.vmem %s277, %s591 [#allocation3]
        %v593 = vld [vmem:[%s592] sm:$0xff]
        %v594 = vld [vmem:[%s592 + $0x8] sm:$0xff]
        %s595 = sadd.s32 %s316, 8
        %p596 = scmp.gt.s32.totalorder %s595, 0
        %s597 = scalar_select %p596, %s595, 0
        %p598 = scmp.lt.s32.totalorder %s597, 15
        %s599 = scalar_select %p598, %s597, 15
        %s600 = ssub.s32 %s599, 1
        %p601 = scmp.gt.s32.totalorder %s600, 0
        %s602 = scalar_select %p601, %s600, 0
        %p603 = scmp.lt.s32.totalorder %s602, 15
        %s604 = scalar_select %p603, %s602, 15
        %s605 = smul.u32 %s604, 16
        %s606 = scalar_lea.vmem %s277, %s605 [#allocation3]
        %v607 = vld [vmem:[%s606] sm:$0xff]
        %v608 = vld [vmem:[%s606 + $0x8] sm:$0xff]
        %p609 = scmp.gt.s32.totalorder %s599, 0
        %s610 = scalar_select %p609, %s599, 0
        %p611 = scmp.lt.s32.totalorder %s610, 15
        %s612 = scalar_select %p611, %s610, 15
        %s613 = smul.u32 %s612, 16
        %s614 = scalar_lea.vmem %s277, %s613 [#allocation3]
        %v615 = vld [vmem:[%s614] sm:$0xff]
        %v616 = vld [vmem:[%s614 + $0x8] sm:$0xff]
        %s617 = sadd.s32 %s599, 1
        %p618 = scmp.gt.s32.totalorder %s617, 0
        %s619 = scalar_select %p618, %s617, 0
        %p620 = scmp.lt.s32.totalorder %s619, 15
        %s621 = scalar_select %p620, %s619, 15
        %s622 = smul.u32 %s621, 16
        %s623 = scalar_lea.vmem %s277, %s622 [#allocation3]
        %v624 = vld [vmem:[%s623] sm:$0xff]
        %v625 = vld [vmem:[%s623 + $0x8] sm:$0xff]
        %646 = vrot.lane.b32.xlu0 %v337, 32
        %v647 = vpop.permute.xlu0 %646
        %648 = vrot.lane.b32.xlu0 %v338, 32
        %v649 = vpop.permute.xlu0 %648
        %650 = vrot.lane.b32.xlu0 %v367, 32
        %v651 = vpop.permute.xlu0 %650
        %652 = vrot.lane.b32.xlu0 %v368, 32
        %v653 = vpop.permute.xlu0 %652
        %654 = vrot.lane.b32.xlu0 %v398, 32
        %v655 = vpop.permute.xlu0 %654
        %656 = vrot.lane.b32.xlu0 %v399, 32
        %v657 = vpop.permute.xlu0 %656
        %658 = vrot.lane.b32.xlu0 %v429, 32
        %v659 = vpop.permute.xlu0 %658
        %660 = vrot.lane.b32.xlu0 %v430, 32
        %v661 = vpop.permute.xlu0 %660
        %662 = vrot.lane.b32.xlu0 %v460, 32
        %v663 = vpop.permute.xlu0 %662
        %664 = vrot.lane.b32.xlu0 %v461, 32
        %v665 = vpop.permute.xlu0 %664
        %666 = vrot.lane.b32.xlu0 %v491, 32
        %v667 = vpop.permute.xlu0 %666
        %668 = vrot.lane.b32.xlu0 %v492, 32
        %v669 = vpop.permute.xlu0 %668
        %670 = vrot.lane.b32.xlu0 %v522, 32
        %v671 = vpop.permute.xlu0 %670
        %672 = vrot.lane.b32.xlu0 %v523, 32
        %v673 = vpop.permute.xlu0 %672
        %674 = vrot.lane.b32.xlu0 %v553, 32
        %v675 = vpop.permute.xlu0 %674
        %676 = vrot.lane.b32.xlu0 %v554, 32
        %v677 = vpop.permute.xlu0 %676
        %678 = vrot.lane.b32.xlu0 %v584, 32
        %v679 = vpop.permute.xlu0 %678
        %680 = vrot.lane.b32.xlu0 %v585, 32
        %v681 = vpop.permute.xlu0 %680
        %682 = vrot.lane.b32.xlu0 %v615, 32
        %v683 = vpop.permute.xlu0 %682
        %684 = vrot.lane.b32.xlu0 %v616, 32
        %v685 = vpop.permute.xlu0 %684
        %726 = vrot.lane.b32.xlu0 %v346, 64
        %v727 = vpop.permute.xlu0 %726
        %728 = vrot.lane.b32.xlu0 %v347, 64
        %v729 = vpop.permute.xlu0 %728
        %730 = vrot.lane.b32.xlu0 %v376, 64
        %v731 = vpop.permute.xlu0 %730
        %732 = vrot.lane.b32.xlu0 %v377, 64
        %v733 = vpop.permute.xlu0 %732
        %734 = vrot.lane.b32.xlu0 %v407, 64
        %v735 = vpop.permute.xlu0 %734
        %736 = vrot.lane.b32.xlu0 %v408, 64
        %v737 = vpop.permute.xlu0 %736
        %738 = vrot.lane.b32.xlu0 %v438, 64
        %v739 = vpop.permute.xlu0 %738
        %740 = vrot.lane.b32.xlu0 %v439, 64
        %v741 = vpop.permute.xlu0 %740
        %742 = vrot.lane.b32.xlu0 %v469, 64
        %v743 = vpop.permute.xlu0 %742
        %744 = vrot.lane.b32.xlu0 %v470, 64
        %v745 = vpop.permute.xlu0 %744
        %746 = vrot.lane.b32.xlu0 %v500, 64
        %v747 = vpop.permute.xlu0 %746
        %748 = vrot.lane.b32.xlu0 %v501, 64
        %v749 = vpop.permute.xlu0 %748
        %750 = vrot.lane.b32.xlu0 %v531, 64
        %v751 = vpop.permute.xlu0 %750
        %752 = vrot.lane.b32.xlu0 %v532, 64
        %v753 = vpop.permute.xlu0 %752
        %754 = vrot.lane.b32.xlu0 %v562, 64
        %v755 = vpop.permute.xlu0 %754
        %756 = vrot.lane.b32.xlu0 %v563, 64
        %v757 = vpop.permute.xlu0 %756
        %758 = vrot.lane.b32.xlu0 %v593, 64
        %v759 = vpop.permute.xlu0 %758
        %760 = vrot.lane.b32.xlu0 %v594, 64
        %v761 = vpop.permute.xlu0 %760
        %762 = vrot.lane.b32.xlu0 %v624, 64
        %v763 = vpop.permute.xlu0 %762
        %764 = vrot.lane.b32.xlu0 %v625, 64
        %v765 = vpop.permute.xlu0 %764
        %vm786 = vcmask 261120
        %v787 = vsel %vm786, %v329, %v647
        %v788 = vsel %vm786, %v330, %v649
        %v789 = vsel %vm786, %v359, %v651
        %v790 = vsel %vm786, %v360, %v653
        %v791 = vsel %vm786, %v390, %v655
        %v792 = vsel %vm786, %v391, %v657
        %v793 = vsel %vm786, %v421, %v659
        %v794 = vsel %vm786, %v422, %v661
        %v795 = vsel %vm786, %v452, %v663
        %v796 = vsel %vm786, %v453, %v665
        %v797 = vsel %vm786, %v483, %v667
        %v798 = vsel %vm786, %v484, %v669
        %v799 = vsel %vm786, %v514, %v671
        %v800 = vsel %vm786, %v515, %v673
        %v801 = vsel %vm786, %v545, %v675
        %v802 = vsel %vm786, %v546, %v677
        %v803 = vsel %vm786, %v576, %v679
        %v804 = vsel %vm786, %v577, %v681
        %v805 = vsel %vm786, %v607, %v683
        %v806 = vsel %vm786, %v608, %v685
        %vm807 = vcmask 523264
        %v808 = vsel %vm807, %v787, %v727
        %v809 = vsel %vm807, %v788, %v729
        %v810 = vsel %vm807, %v789, %v731
        %v811 = vsel %vm807, %v790, %v733
        %v812 = vsel %vm807, %v791, %v735
        %v813 = vsel %vm807, %v792, %v737
        %v814 = vsel %vm807, %v793, %v739
        %v815 = vsel %vm807, %v794, %v741
        %v816 = vsel %vm807, %v795, %v743
        %v817 = vsel %vm807, %v796, %v745
        %v818 = vsel %vm807, %v797, %v747
        %v819 = vsel %vm807, %v798, %v749
        %v820 = vsel %vm807, %v799, %v751
        %v821 = vsel %vm807, %v800, %v753
        %v822 = vsel %vm807, %v801, %v755
        %v823 = vsel %vm807, %v802, %v757
        %v824 = vsel %vm807, %v803, %v759
        %v825 = vsel %vm807, %v804, %v761
        %v826 = vsel %vm807, %v805, %v763
        %v827 = vsel %vm807, %v806, %v765
        %v828 = vld [vmem:[#allocation6] sm:$0xff]
        %v829 = vld [vmem:[#allocation6 + $0x8] sm:$0xff]
        %v830 = vld [vmem:[#allocation6 + $0x10] sm:$0xff]
        %v831 = vld [vmem:[#allocation6 + $0x18] sm:$0xff]
        %v832 = vld [vmem:[#allocation6 + $0x20] sm:$0xff]
        %v833 = vld [vmem:[#allocation6 + $0x28] sm:$0xff]
        %v834 = vld [vmem:[#allocation6 + $0x30] sm:$0xff]
        %v835 = vld [vmem:[#allocation6 + $0x38] sm:$0xff]
        %v836 = vld [vmem:[#allocation6 + $0x40] sm:$0xff]
        %v837 = vld [vmem:[#allocation6 + $0x48] sm:$0xff]
        %v838 = vld [vmem:[#allocation6 + $0x50] sm:$0xff]
        %v839 = vld [vmem:[#allocation6 + $0x58] sm:$0xff]
        %vm840 = vcmask 785408
        %v842 = vsel %vm840, %v808, 0
        %v845 = vsel %vm840, %v809, 0
        %v848 = vsel %vm840, %v810, 0
        %v851 = vsel %vm840, %v811, 0
        %v854 = vsel %vm840, %v812, 0
        %v857 = vsel %vm840, %v813, 0
        %v860 = vsel %vm840, %v814, 0
        %v863 = vsel %vm840, %v815, 0
        %v866 = vsel %vm840, %v816, 0
        %v869 = vsel %vm840, %v817, 0
        %v872 = vsel %vm840, %v818, 0
        %v875 = vsel %vm840, %v819, 0
        %v878 = vsel %vm840, %v820, 0
        %v881 = vsel %vm840, %v821, 0
        %v884 = vsel %vm840, %v822, 0
        %v887 = vsel %vm840, %v823, 0
        %v890 = vsel %vm840, %v824, 0
        %v893 = vsel %vm840, %v825, 0
        %v896 = vsel %vm840, %v826, 0
        %v899 = vsel %vm840, %v827, 0
        %901 = vmatprep.subr.mxu0 0.0
        %902 = vmatpush1.msra.mxu0 %v828
        %903 = vmatprep.subr.mxu0 0.0
        %904 = vmatpush1.msra.mxu0 %v829
        %905 = vmatprep.subr.mxu0 0.0
        %906 = vmatpush1.msra.mxu0 %v830
        %907 = vmatprep.subr.mxu0 0.0
        %908 = vmatpush1.msra.mxu0 %v831
        %909 = vmatprep.subr.mxu0 0.0
        %910 = vmatpush1.msra.mxu0 %v832
        %911 = vmatprep.subr.mxu0 0.0
        %912 = vmatpush1.msra.mxu0 %v833
        %913 = vmatprep.subr.mxu0 0.0
        %914 = vmatpush1.msra.mxu0 %v834
        %915 = vmatprep.subr.mxu0 0.0
        %916 = vmatpush1.msra.mxu0 %v835
        %917 = vmatprep.subr.mxu0 0.0
        %918 = vmatpush1.msra.mxu0 %v836
        %919 = vmatprep.subr.mxu0 0.0
        %920 = vmatpush1.msra.mxu0 %v837
        %921 = vmatprep.subr.mxu0 0.0
        %922 = vmatpush1.msra.mxu0 %v838
        %923 = vmatprep.subr.mxu0 0.0
        %924 = vmatpush1.msra.mxu0 %v839
        %925 = vmatprep.subr.mxu0 0.0
        %926 = vmatpush1.msra.mxu0 0.0
        %927 = vmatprep.subr.mxu0 0.0
        %928 = vmatpush1.msra.mxu0 0.0
        %929 = vmatprep.subr.mxu0 0.0
        %930 = vmatpush1.msra.mxu0 0.0
        %931 = vmatprep.subr.mxu0 0.0
        %932 = vmatpush1.msra.mxu0 0.0
        %933 = vmatprep.subr.mxu0 0.0
        %934 = vmatpush1.msra.mxu0 0.0
        %935 = vmatprep.subr.mxu0 0.0
        %936 = vmatpush1.msra.mxu0 0.0
        %937 = vmatprep.subr.mxu0 0.0
        %938 = vmatpush1.msra.mxu0 0.0
        %939 = vmatprep.subr.mxu0 0.0
        %940 = vmatpush1.msra.mxu0 0.0
        %941 = vmatprep.subr.mxu0 0.0
        %942 = vmatpush1.msra.mxu0 0.0
        %943 = vmatprep.subr.mxu0 0.0
        %944 = vmatpush1.msra.mxu0 0.0
        %945 = vmatprep.subr.mxu0 0.0
        %946 = vmatpush1.msra.mxu0 0.0
        %947 = vmatprep.subr.mxu0 0.0
        %948 = vmatpush1.msra.mxu0 0.0
        %949 = vmatprep.subr.mxu0 0.0
        %950 = vmatpush1.msra.mxu0 0.0
        %951 = vmatprep.subr.mxu0 0.0
        %952 = vmatpush1.msra.mxu0 0.0
        %953 = vmatprep.subr.mxu0 0.0
        %954 = vmatpush1.msra.mxu0 0.0
        %955 = vmatprep.subr.mxu0 0.0
        %956 = vmatpush1.msra.mxu0 0.0
        %957 = vmatprep.subr.mxu0 0.0
        %958 = vmatpush1.msra.mxu0 0.0
        %959 = vmatprep.subr.mxu0 0.0
        %960 = vmatpush1.msra.mxu0 0.0
        %961 = vmatprep.subr.mxu0 0.0
        %962 = vmatpush1.msra.mxu0 0.0
        %963 = vmatprep.subr.mxu0 0.0
        %964 = vmatpush1.msra.mxu0 0.0
        %965 = vmatprep.mubr.f32.mxu0 0.0
        %966 = vmatmul.mubr.f32.gmra.mrb[0].mxu0 %v842
        %v967 = vpop.f32.mrb[0].mxu0
        %v968 = vadd.f32 0.0, %v967
        %v969 = vpop.f32.mrb[0].mxu0
        %970 = vmatprep.mubr.f32.mxu0 0.0
        %971 = vmatmul.mubr.f32.gmra.mrb[0].mxu0 %v845
        %v972 = vpop.f32.mrb[0].mxu0
        %v973 = vadd.f32 0.0, %v972
        %v974 = vpop.f32.mrb[0].mxu0
        %975 = vmatprep.mubr.f32.mxu0 0.0
        %976 = vmatmul.mubr.f32.gmra.mrb[0].mxu0 %v848
        %v977 = vpop.f32.mrb[0].mxu0
        %v978 = vadd.f32 0.0, %v977
        %v979 = vpop.f32.mrb[0].mxu0
        %980 = vmatprep.mubr.f32.mxu0 0.0
        %981 = vmatmul.mubr.f32.gmra.mrb[0].mxu0 %v851
        %v982 = vpop.f32.mrb[0].mxu0
        %v983 = vadd.f32 0.0, %v982
        %v984 = vpop.f32.mrb[0].mxu0
        %985 = vmatprep.mubr.f32.mxu0 0.0
        %986 = vmatmul.mubr.f32.gmra.mrb[0].mxu0 %v854
        %v987 = vpop.f32.mrb[0].mxu0
        %v988 = vadd.f32 0.0, %v987
        %v989 = vpop.f32.mrb[0].mxu0
        %990 = vmatprep.mubr.f32.mxu0 0.0
        %991 = vmatmul.mubr.f32.gmra.mrb[0].mxu0 %v857
        %v992 = vpop.f32.mrb[0].mxu0
        %v993 = vadd.f32 0.0, %v992
        %v994 = vpop.f32.mrb[0].mxu0
        %995 = vmatprep.mubr.f32.mxu0 0.0
        %996 = vmatmul.mubr.f32.gmra.mrb[0].mxu0 %v860
        %v997 = vpop.f32.mrb[0].mxu0
        %v998 = vadd.f32 0.0, %v997
        %v999 = vpop.f32.mrb[0].mxu0
        %1000 = vmatprep.mubr.f32.mxu0 0.0
        %1001 = vmatmul.mubr.f32.gmra.mrb[0].mxu0 %v863
        %v1002 = vpop.f32.mrb[0].mxu0
        %v1003 = vadd.f32 0.0, %v1002
        %v1004 = vpop.f32.mrb[0].mxu0
        %1005 = vmatprep.mubr.f32.mxu0 0.0
        %1006 = vmatmul.mubr.f32.gmra.mrb[0].mxu0 %v866
        %v1007 = vpop.f32.mrb[0].mxu0
        %v1008 = vadd.f32 0.0, %v1007
        %v1009 = vpop.f32.mrb[0].mxu0
        %1010 = vmatprep.mubr.f32.mxu0 0.0
        %1011 = vmatmul.mubr.f32.gmra.mrb[0].mxu0 %v869
        %v1012 = vpop.f32.mrb[0].mxu0
        %v1013 = vadd.f32 0.0, %v1012
        %v1014 = vpop.f32.mrb[0].mxu0
        %1015 = vmatprep.mubr.f32.mxu0 0.0
        %1016 = vmatmul.mubr.f32.gmra.mrb[0].mxu0 %v872
        %v1017 = vpop.f32.mrb[0].mxu0
        %v1018 = vadd.f32 0.0, %v1017
        %v1019 = vpop.f32.mrb[0].mxu0
        %1020 = vmatprep.mubr.f32.mxu0 0.0
        %1021 = vmatmul.mubr.f32.gmra.mrb[0].mxu0 %v875
        %v1022 = vpop.f32.mrb[0].mxu0
        %v1023 = vadd.f32 0.0, %v1022
        %v1024 = vpop.f32.mrb[0].mxu0
        %1025 = vmatprep.mubr.f32.mxu0 0.0
        %1026 = vmatmul.mubr.f32.gmra.mrb[0].mxu0 %v878
        %v1027 = vpop.f32.mrb[0].mxu0
        %v1028 = vadd.f32 0.0, %v1027
        %v1029 = vpop.f32.mrb[0].mxu0
        %1030 = vmatprep.mubr.f32.mxu0 0.0
        %1031 = vmatmul.mubr.f32.gmra.mrb[0].mxu0 %v881
        %v1032 = vpop.f32.mrb[0].mxu0
        %v1033 = vadd.f32 0.0, %v1032
        %v1034 = vpop.f32.mrb[0].mxu0
        %1035 = vmatprep.mubr.f32.mxu0 0.0
        %1036 = vmatmul.mubr.f32.gmra.mrb[0].mxu0 %v884
        %v1037 = vpop.f32.mrb[0].mxu0
        %v1038 = vadd.f32 0.0, %v1037
        %v1039 = vpop.f32.mrb[0].mxu0
        %1040 = vmatprep.mubr.f32.mxu0 0.0
        %1041 = vmatmul.mubr.f32.gmra.mrb[0].mxu0 %v887
        %v1042 = vpop.f32.mrb[0].mxu0
        %v1043 = vadd.f32 0.0, %v1042
        %v1044 = vpop.f32.mrb[0].mxu0
        %1045 = vmatprep.mubr.f32.mxu0 0.0
        %1046 = vmatmul.mubr.f32.gmra.mrb[0].mxu0 %v890
        %v1047 = vpop.f32.mrb[0].mxu0
        %v1048 = vadd.f32 0.0, %v1047
        %v1049 = vpop.f32.mrb[0].mxu0
        %1050 = vmatprep.mubr.f32.mxu0 0.0
        %1051 = vmatmul.mubr.f32.gmra.mrb[0].mxu0 %v893
        %v1052 = vpop.f32.mrb[0].mxu0
        %v1053 = vadd.f32 0.0, %v1052
        %v1054 = vpop.f32.mrb[0].mxu0
        %1055 = vmatprep.mubr.f32.mxu0 0.0
        %1056 = vmatmul.mubr.f32.gmra.mrb[0].mxu0 %v896
        %v1057 = vpop.f32.mrb[0].mxu0
        %v1058 = vadd.f32 0.0, %v1057
        %v1059 = vpop.f32.mrb[0].mxu0
        %1060 = vmatprep.mubr.f32.mxu0 0.0
        %1061 = vmatmul.mubr.f32.gmra.mrb[0].mxu0 %v899
        %v1062 = vpop.f32.mrb[0].mxu0
        %v1063 = vadd.f32 0.0, %v1062
        %v1064 = vpop.f32.mrb[0].mxu0
        %1065 = vdwg.mxu0
        %vm1086 = vcmask 1040384
        %v1087 = vrot.slane %v968, 7
        %v1088 = vrot.slane %v973, 7
        %v1089 = vsel %vm1086, %v1087, %v1088
        %v1090 = vrot.slane %v978, 7
        %v1091 = vrot.slane %v983, 7
        %v1092 = vsel %vm1086, %v1090, %v1091
        %v1093 = vrot.slane %v988, 7
        %v1094 = vrot.slane %v993, 7
        %v1095 = vsel %vm1086, %v1093, %v1094
        %v1096 = vrot.slane %v998, 7
        %v1097 = vrot.slane %v1003, 7
        %v1098 = vsel %vm1086, %v1096, %v1097
        %v1099 = vrot.slane %v1008, 7
        %v1100 = vrot.slane %v1013, 7
        %v1101 = vsel %vm1086, %v1099, %v1100
        %v1102 = vrot.slane %v1018, 7
        %v1103 = vrot.slane %v1023, 7
        %v1104 = vsel %vm1086, %v1102, %v1103
        %v1105 = vrot.slane %v1028, 7
        %v1106 = vrot.slane %v1033, 7
        %v1107 = vsel %vm1086, %v1105, %v1106
        %v1108 = vrot.slane %v1038, 7
        %v1109 = vrot.slane %v1043, 7
        %v1110 = vsel %vm1086, %v1108, %v1109
        %v1111 = vrot.slane %v1048, 7
        %v1112 = vrot.slane %v1053, 7
        %v1113 = vsel %vm1086, %v1111, %v1112
        %v1114 = vrot.slane %v1058, 7
        %v1115 = vrot.slane %v1063, 7
        %v1116 = vsel %vm1086, %v1114, %v1115
        %v1137 = vsel %vm1086, %v968, %v1087
        %v1138 = vsel %vm1086, %v978, %v1090
        %v1139 = vsel %vm1086, %v988, %v1093
        %v1140 = vsel %vm1086, %v998, %v1096
        %v1141 = vsel %vm1086, %v1008, %v1099
        %v1142 = vsel %vm1086, %v1018, %v1102
        %v1143 = vsel %vm1086, %v1028, %v1105
        %v1144 = vsel %vm1086, %v1038, %v1108
        %v1145 = vsel %vm1086, %v1048, %v1111
        %v1146 = vsel %vm1086, %v1058, %v1114
        %vm1147 = vcmask 1046528
        %v1148 = vrot.slane %v968, 1
        %v1149 = vrot.slane %v973, 1
        %v1150 = vsel %vm1147, %v1148, %v1149
        %v1151 = vrot.slane %v978, 1
        %v1152 = vrot.slane %v983, 1
        %v1153 = vsel %vm1147, %v1151, %v1152
        %v1154 = vrot.slane %v988, 1
        %v1155 = vrot.slane %v993, 1
        %v1156 = vsel %vm1147, %v1154, %v1155
        %v1157 = vrot.slane %v998, 1
        %v1158 = vrot.slane %v1003, 1
        %v1159 = vsel %vm1147, %v1157, %v1158
        %v1160 = vrot.slane %v1008, 1
        %v1161 = vrot.slane %v1013, 1
        %v1162 = vsel %vm1147, %v1160, %v1161
        %v1163 = vrot.slane %v1018, 1
        %v1164 = vrot.slane %v1023, 1
        %v1165 = vsel %vm1147, %v1163, %v1164
        %v1166 = vrot.slane %v1028, 1
        %v1167 = vrot.slane %v1033, 1
        %v1168 = vsel %vm1147, %v1166, %v1167
        %v1169 = vrot.slane %v1038, 1
        %v1170 = vrot.slane %v1043, 1
        %v1171 = vsel %vm1147, %v1169, %v1170
        %v1172 = vrot.slane %v1048, 1
        %v1173 = vrot.slane %v1053, 1
        %v1174 = vsel %vm1147, %v1172, %v1173
        %v1175 = vrot.slane %v1058, 1
        %v1176 = vrot.slane %v1063, 1
        %v1177 = vsel %vm1147, %v1175, %v1176
        %v1188 = vsel %vm1147, %v1149, %v973
        %v1189 = vsel %vm1147, %v1152, %v983
        %v1190 = vsel %vm1147, %v1155, %v993
        %v1191 = vsel %vm1147, %v1158, %v1003
        %v1192 = vsel %vm1147, %v1161, %v1013
        %v1193 = vsel %vm1147, %v1164, %v1023
        %v1194 = vsel %vm1147, %v1167, %v1033
        %v1195 = vsel %vm1147, %v1170, %v1043
        %v1196 = vsel %vm1147, %v1173, %v1053
        %v1197 = vsel %vm1147, %v1176, %v1063
        %1198 = vrot.lane.b32.xlu0 %v968, 96
        %v1199 = vpop.permute.xlu0 %1198
        %1200 = vrot.lane.b32.xlu0 %v973, 96
        %v1201 = vpop.permute.xlu0 %1200
        %1202 = vrot.lane.b32.xlu0 %v978, 96
        %v1203 = vpop.permute.xlu0 %1202
        %1204 = vrot.lane.b32.xlu0 %v983, 96
        %v1205 = vpop.permute.xlu0 %1204
        %1206 = vrot.lane.b32.xlu0 %v988, 96
        %v1207 = vpop.permute.xlu0 %1206
        %1208 = vrot.lane.b32.xlu0 %v993, 96
        %v1209 = vpop.permute.xlu0 %1208
        %1210 = vrot.lane.b32.xlu0 %v998, 96
        %v1211 = vpop.permute.xlu0 %1210
        %1212 = vrot.lane.b32.xlu0 %v1003, 96
        %v1213 = vpop.permute.xlu0 %1212
        %1214 = vrot.lane.b32.xlu0 %v1008, 96
        %v1215 = vpop.permute.xlu0 %1214
        %1216 = vrot.lane.b32.xlu0 %v1013, 96
        %v1217 = vpop.permute.xlu0 %1216
        %1218 = vrot.lane.b32.xlu0 %v1018, 96
        %v1219 = vpop.permute.xlu0 %1218
        %1220 = vrot.lane.b32.xlu0 %v1023, 96
        %v1221 = vpop.permute.xlu0 %1220
        %1222 = vrot.lane.b32.xlu0 %v1028, 96
        %v1223 = vpop.permute.xlu0 %1222
        %1224 = vrot.lane.b32.xlu0 %v1033, 96
        %v1225 = vpop.permute.xlu0 %1224
        %1226 = vrot.lane.b32.xlu0 %v1038, 96
        %v1227 = vpop.permute.xlu0 %1226
        %1228 = vrot.lane.b32.xlu0 %v1043, 96
        %v1229 = vpop.permute.xlu0 %1228
        %1230 = vrot.lane.b32.xlu0 %v1048, 96
        %v1231 = vpop.permute.xlu0 %1230
        %1232 = vrot.lane.b32.xlu0 %v1053, 96
        %v1233 = vpop.permute.xlu0 %1232
        %1234 = vrot.lane.b32.xlu0 %v1058, 96
        %v1235 = vpop.permute.xlu0 %1234
        %1236 = vrot.lane.b32.xlu0 %v1063, 96
        %v1237 = vpop.permute.xlu0 %1236
        %v1258 = vadd.f32 %v1137, %v1199
        %v1259 = vadd.f32 %v1089, %v1201
        %v1260 = vadd.f32 %v1138, %v1203
        %v1261 = vadd.f32 %v1092, %v1205
        %v1262 = vadd.f32 %v1139, %v1207
        %v1263 = vadd.f32 %v1095, %v1209
        %v1264 = vadd.f32 %v1140, %v1211
        %v1265 = vadd.f32 %v1098, %v1213
        %v1266 = vadd.f32 %v1141, %v1215
        %v1267 = vadd.f32 %v1101, %v1217
        %v1268 = vadd.f32 %v1142, %v1219
        %v1269 = vadd.f32 %v1104, %v1221
        %v1270 = vadd.f32 %v1143, %v1223
        %v1271 = vadd.f32 %v1107, %v1225
        %v1272 = vadd.f32 %v1144, %v1227
        %v1273 = vadd.f32 %v1110, %v1229
        %v1274 = vadd.f32 %v1145, %v1231
        %v1275 = vadd.f32 %v1113, %v1233
        %v1276 = vadd.f32 %v1146, %v1235
        %v1277 = vadd.f32 %v1116, %v1237
        %1288 = vrot.lane.b32.xlu0 %v1150, 64
        %v1289 = vpop.permute.xlu0 %1288
        %1290 = vrot.lane.b32.xlu0 %v1188, 64
        %v1291 = vpop.permute.xlu0 %1290
        %1292 = vrot.lane.b32.xlu0 %v1153, 64
        %v1293 = vpop.permute.xlu0 %1292
        %1294 = vrot.lane.b32.xlu0 %v1189, 64
        %v1295 = vpop.permute.xlu0 %1294
        %1296 = vrot.lane.b32.xlu0 %v1156, 64
        %v1297 = vpop.permute.xlu0 %1296
        %1298 = vrot.lane.b32.xlu0 %v1190, 64
        %v1299 = vpop.permute.xlu0 %1298
        %1300 = vrot.lane.b32.xlu0 %v1159, 64
        %v1301 = vpop.permute.xlu0 %1300
        %1302 = vrot.lane.b32.xlu0 %v1191, 64
        %v1303 = vpop.permute.xlu0 %1302
        %1304 = vrot.lane.b32.xlu0 %v1162, 64
        %v1305 = vpop.permute.xlu0 %1304
        %1306 = vrot.lane.b32.xlu0 %v1192, 64
        %v1307 = vpop.permute.xlu0 %1306
        %1308 = vrot.lane.b32.xlu0 %v1165, 64
        %v1309 = vpop.permute.xlu0 %1308
        %1310 = vrot.lane.b32.xlu0 %v1193, 64
        %v1311 = vpop.permute.xlu0 %1310
        %1312 = vrot.lane.b32.xlu0 %v1168, 64
        %v1313 = vpop.permute.xlu0 %1312
        %1314 = vrot.lane.b32.xlu0 %v1194, 64
        %v1315 = vpop.permute.xlu0 %1314
        %1316 = vrot.lane.b32.xlu0 %v1171, 64
        %v1317 = vpop.permute.xlu0 %1316
        %1318 = vrot.lane.b32.xlu0 %v1195, 64
        %v1319 = vpop.permute.xlu0 %1318
        %1320 = vrot.lane.b32.xlu0 %v1174, 64
        %v1321 = vpop.permute.xlu0 %1320
        %1322 = vrot.lane.b32.xlu0 %v1196, 64
        %v1323 = vpop.permute.xlu0 %1322
        %1324 = vrot.lane.b32.xlu0 %v1177, 64
        %v1325 = vpop.permute.xlu0 %1324
        %1326 = vrot.lane.b32.xlu0 %v1197, 64
        %v1327 = vpop.permute.xlu0 %1326
        %v1348 = vadd.f32 %v1258, %v1289
        %v1349 = vadd.f32 %v1259, %v1291
        %v1350 = vadd.f32 %v1260, %v1293
        %v1351 = vadd.f32 %v1261, %v1295
        %v1352 = vadd.f32 %v1262, %v1297
        %v1353 = vadd.f32 %v1263, %v1299
        %v1354 = vadd.f32 %v1264, %v1301
        %v1355 = vadd.f32 %v1265, %v1303
        %v1356 = vadd.f32 %v1266, %v1305
        %v1357 = vadd.f32 %v1267, %v1307
        %v1358 = vadd.f32 %v1268, %v1309
        %v1359 = vadd.f32 %v1269, %v1311
        %v1360 = vadd.f32 %v1270, %v1313
        %v1361 = vadd.f32 %v1271, %v1315
        %v1362 = vadd.f32 %v1272, %v1317
        %v1363 = vadd.f32 %v1273, %v1319
        %v1364 = vadd.f32 %v1274, %v1321
        %v1365 = vadd.f32 %v1275, %v1323
        %v1366 = vadd.f32 %v1276, %v1325
        %v1367 = vadd.f32 %v1277, %v1327
        %v1368 = vld [vmem:[%s2] sm:$0x1]
        %v1370 = vlaneseq
        %v1371 = vshrl.u32 %v1370, 7
        %v1372 = vsub.s32 0, %v1371
        %v1373 = vrot.slane %v1368, %v1372
        %v1375 = vadd.f32 %v1348, %v1373
        %v1376 = vadd.f32 %v1349, %v1373
        %v1377 = vadd.f32 %v1350, %v1373
        %v1378 = vadd.f32 %v1351, %v1373
        %v1379 = vadd.f32 %v1352, %v1373
        %v1380 = vadd.f32 %v1353, %v1373
        %v1381 = vadd.f32 %v1354, %v1373
        %v1382 = vadd.f32 %v1355, %v1373
        %v1383 = vadd.f32 %v1356, %v1373
        %v1384 = vadd.f32 %v1357, %v1373
        %v1385 = vadd.f32 %v1358, %v1373
        %v1386 = vadd.f32 %v1359, %v1373
        %v1387 = vadd.f32 %v1360, %v1373
        %v1388 = vadd.f32 %v1361, %v1373
        %v1389 = vadd.f32 %v1362, %v1373
        %v1390 = vadd.f32 %v1363, %v1373
        %v1391 = vadd.f32 %v1364, %v1373
        %v1392 = vadd.f32 %v1365, %v1373
        %v1393 = vadd.f32 %v1366, %v1373
        %v1394 = vadd.f32 %v1367, %v1373
        %vm1395 = vcmp.ge.f32.partialorder %v1375, 0.0
        %vm1396 = vcmp.ge.f32.partialorder %v1376, 0.0
        %vm1397 = vcmp.ge.f32.partialorder %v1377, 0.0
        %vm1398 = vcmp.ge.f32.partialorder %v1378, 0.0
        %vm1399 = vcmp.ge.f32.partialorder %v1379, 0.0
        %vm1400 = vcmp.ge.f32.partialorder %v1380, 0.0
        %vm1401 = vcmp.ge.f32.partialorder %v1381, 0.0
        %vm1402 = vcmp.ge.f32.partialorder %v1382, 0.0
        %vm1403 = vcmp.ge.f32.partialorder %v1383, 0.0
        %vm1404 = vcmp.ge.f32.partialorder %v1384, 0.0
        %vm1405 = vcmp.ge.f32.partialorder %v1385, 0.0
        %vm1406 = vcmp.ge.f32.partialorder %v1386, 0.0
        %vm1407 = vcmp.ge.f32.partialorder %v1387, 0.0
        %vm1408 = vcmp.ge.f32.partialorder %v1388, 0.0
        %vm1409 = vcmp.ge.f32.partialorder %v1389, 0.0
        %vm1410 = vcmp.ge.f32.partialorder %v1390, 0.0
        %vm1411 = vcmp.ge.f32.partialorder %v1391, 0.0
        %vm1412 = vcmp.ge.f32.partialorder %v1392, 0.0
        %vm1413 = vcmp.ge.f32.partialorder %v1393, 0.0
        %vm1414 = vcmp.ge.f32.partialorder %v1394, 0.0
        %v1415 = vstv %s315
        %v1416 = vmul.f32 %v1415, %v1375
        %v1417 = vmul.f32 %v1415, %v1376
        %v1418 = vmul.f32 %v1415, %v1377
        %v1419 = vmul.f32 %v1415, %v1378
        %v1420 = vmul.f32 %v1415, %v1379
        %v1421 = vmul.f32 %v1415, %v1380
        %v1422 = vmul.f32 %v1415, %v1381
        %v1423 = vmul.f32 %v1415, %v1382
        %v1424 = vmul.f32 %v1415, %v1383
        %v1425 = vmul.f32 %v1415, %v1384
        %v1426 = vmul.f32 %v1415, %v1385
        %v1427 = vmul.f32 %v1415, %v1386
        %v1428 = vmul.f32 %v1415, %v1387
        %v1429 = vmul.f32 %v1415, %v1388
        %v1430 = vmul.f32 %v1415, %v1389
        %v1431 = vmul.f32 %v1415, %v1390
        %v1432 = vmul.f32 %v1415, %v1391
        %v1433 = vmul.f32 %v1415, %v1392
        %v1434 = vmul.f32 %v1415, %v1393
        %v1435 = vmul.f32 %v1415, %v1394
        %v1436 = vsel %vm1395, %v1375, %v1416
        %v1437 = vsel %vm1396, %v1376, %v1417
        %v1438 = vsel %vm1397, %v1377, %v1418
        %v1439 = vsel %vm1398, %v1378, %v1419
        %v1440 = vsel %vm1399, %v1379, %v1420
        %v1441 = vsel %vm1400, %v1380, %v1421
        %v1442 = vsel %vm1401, %v1381, %v1422
        %v1443 = vsel %vm1402, %v1382, %v1423
        %v1444 = vsel %vm1403, %v1383, %v1424
        %v1445 = vsel %vm1404, %v1384, %v1425
        %v1446 = vsel %vm1405, %v1385, %v1426
        %v1447 = vsel %vm1406, %v1386, %v1427
        %v1448 = vsel %vm1407, %v1387, %v1428
        %v1449 = vsel %vm1408, %v1388, %v1429
        %v1450 = vsel %vm1409, %v1389, %v1430
        %v1451 = vsel %vm1410, %v1390, %v1431
        %v1452 = vsel %vm1411, %v1391, %v1432
        %v1453 = vsel %vm1412, %v1392, %v1433
        %v1454 = vsel %vm1413, %v1393, %v1434
        %v1455 = vsel %vm1414, %v1394, %v1435
        %1472 = vrot.lane.b32.xlu0 %v1438, 32
        %v1473 = vpop.permute.xlu0 %1472
        %1474 = vrot.lane.b32.xlu0 %v1439, 32
        %v1475 = vpop.permute.xlu0 %1474
        %1476 = vrot.lane.b32.xlu0 %v1440, 32
        %v1477 = vpop.permute.xlu0 %1476
        %1478 = vrot.lane.b32.xlu0 %v1441, 32
        %v1479 = vpop.permute.xlu0 %1478
        %1480 = vrot.lane.b32.xlu0 %v1442, 32
        %v1481 = vpop.permute.xlu0 %1480
        %1482 = vrot.lane.b32.xlu0 %v1443, 32
        %v1483 = vpop.permute.xlu0 %1482
        %1484 = vrot.lane.b32.xlu0 %v1444, 32
        %v1485 = vpop.permute.xlu0 %1484
        %1486 = vrot.lane.b32.xlu0 %v1445, 32
        %v1487 = vpop.permute.xlu0 %1486
        %1488 = vrot.lane.b32.xlu0 %v1446, 32
        %v1489 = vpop.permute.xlu0 %1488
        %1490 = vrot.lane.b32.xlu0 %v1447, 32
        %v1491 = vpop.permute.xlu0 %1490
        %1492 = vrot.lane.b32.xlu0 %v1448, 32
        %v1493 = vpop.permute.xlu0 %1492
        %1494 = vrot.lane.b32.xlu0 %v1449, 32
        %v1495 = vpop.permute.xlu0 %1494
        %1496 = vrot.lane.b32.xlu0 %v1450, 32
        %v1497 = vpop.permute.xlu0 %1496
        %1498 = vrot.lane.b32.xlu0 %v1451, 32
        %v1499 = vpop.permute.xlu0 %1498
        %1500 = vrot.lane.b32.xlu0 %v1452, 32
        %v1501 = vpop.permute.xlu0 %1500
        %1502 = vrot.lane.b32.xlu0 %v1453, 32
        %v1503 = vpop.permute.xlu0 %1502
        %1522 = vrot.lane.b32.xlu0 %v1440, 64
        %v1523 = vpop.permute.xlu0 %1522
        %1524 = vrot.lane.b32.xlu0 %v1441, 64
        %v1525 = vpop.permute.xlu0 %1524
        %1526 = vrot.lane.b32.xlu0 %v1442, 64
        %v1527 = vpop.permute.xlu0 %1526
        %1528 = vrot.lane.b32.xlu0 %v1443, 64
        %v1529 = vpop.permute.xlu0 %1528
        %1530 = vrot.lane.b32.xlu0 %v1444, 64
        %v1531 = vpop.permute.xlu0 %1530
        %1532 = vrot.lane.b32.xlu0 %v1445, 64
        %v1533 = vpop.permute.xlu0 %1532
        %1534 = vrot.lane.b32.xlu0 %v1446, 64
        %v1535 = vpop.permute.xlu0 %1534
        %1536 = vrot.lane.b32.xlu0 %v1447, 64
        %v1537 = vpop.permute.xlu0 %1536
        %1538 = vrot.lane.b32.xlu0 %v1448, 64
        %v1539 = vpop.permute.xlu0 %1538
        %1540 = vrot.lane.b32.xlu0 %v1449, 64
        %v1541 = vpop.permute.xlu0 %1540
        %1542 = vrot.lane.b32.xlu0 %v1450, 64
        %v1543 = vpop.permute.xlu0 %1542
        %1544 = vrot.lane.b32.xlu0 %v1451, 64
        %v1545 = vpop.permute.xlu0 %1544
        %1546 = vrot.lane.b32.xlu0 %v1452, 64
        %v1547 = vpop.permute.xlu0 %1546
        %1548 = vrot.lane.b32.xlu0 %v1453, 64
        %v1549 = vpop.permute.xlu0 %1548
        %1550 = vrot.lane.b32.xlu0 %v1454, 64
        %v1551 = vpop.permute.xlu0 %1550
        %1552 = vrot.lane.b32.xlu0 %v1455, 64
        %v1553 = vpop.permute.xlu0 %1552
        %v1570 = vsel %vm786, %v1436, %v1473
        %v1571 = vsel %vm786, %v1437, %v1475
        %v1572 = vsel %vm786, %v1438, %v1477
        %v1573 = vsel %vm786, %v1439, %v1479
        %v1574 = vsel %vm786, %v1440, %v1481
        %v1575 = vsel %vm786, %v1441, %v1483
        %v1576 = vsel %vm786, %v1442, %v1485
        %v1577 = vsel %vm786, %v1443, %v1487
        %v1578 = vsel %vm786, %v1444, %v1489
        %v1579 = vsel %vm786, %v1445, %v1491
        %v1580 = vsel %vm786, %v1446, %v1493
        %v1581 = vsel %vm786, %v1447, %v1495
        %v1582 = vsel %vm786, %v1448, %v1497
        %v1583 = vsel %vm786, %v1449, %v1499
        %v1584 = vsel %vm786, %v1450, %v1501
        %v1585 = vsel %vm786, %v1451, %v1503
        %v1586 = vsel %vm807, %v1570, %v1523
        %v1587 = vsel %vm807, %v1571, %v1525
        %v1588 = vsel %vm807, %v1572, %v1527
        %v1589 = vsel %vm807, %v1573, %v1529
        %v1590 = vsel %vm807, %v1574, %v1531
        %v1591 = vsel %vm807, %v1575, %v1533
        %v1592 = vsel %vm807, %v1576, %v1535
        %v1593 = vsel %vm807, %v1577, %v1537
        %v1594 = vsel %vm807, %v1578, %v1539
        %v1595 = vsel %vm807, %v1579, %v1541
        %v1596 = vsel %vm807, %v1580, %v1543
        %v1597 = vsel %vm807, %v1581, %v1545
        %v1598 = vsel %vm807, %v1582, %v1547
        %v1599 = vsel %vm807, %v1583, %v1549
        %v1600 = vsel %vm807, %v1584, %v1551
        %v1601 = vsel %vm807, %v1585, %v1553
        %v1602 = vld [vmem:[#allocation8] sm:$0xff]
        %v1603 = vld [vmem:[#allocation8 + $0x8] sm:$0xff]
        %v1604 = vld [vmem:[#allocation8 + $0x10] sm:$0xff]
        %v1605 = vld [vmem:[#allocation8 + $0x18] sm:$0xff]
        %v1606 = vld [vmem:[#allocation8 + $0x20] sm:$0xff]
        %v1607 = vld [vmem:[#allocation8 + $0x28] sm:$0xff]
        %v1608 = vld [vmem:[#allocation8 + $0x30] sm:$0xff]
        %v1609 = vld [vmem:[#allocation8 + $0x38] sm:$0xff]
        %v1610 = vld [vmem:[#allocation8 + $0x40] sm:$0xff]
        %v1611 = vld [vmem:[#allocation8 + $0x48] sm:$0xff]
        %v1612 = vld [vmem:[#allocation8 + $0x50] sm:$0xff]
        %v1613 = vld [vmem:[#allocation8 + $0x58] sm:$0xff]
        %v1615 = vsel %vm840, %v1586, 0
        %v1618 = vsel %vm840, %v1587, 0
        %v1621 = vsel %vm840, %v1588, 0
        %v1624 = vsel %vm840, %v1589, 0
        %v1627 = vsel %vm840, %v1590, 0
        %v1630 = vsel %vm840, %v1591, 0
        %v1633 = vsel %vm840, %v1592, 0
        %v1636 = vsel %vm840, %v1593, 0
        %v1639 = vsel %vm840, %v1594, 0
        %v1642 = vsel %vm840, %v1595, 0
        %v1645 = vsel %vm840, %v1596, 0
        %v1648 = vsel %vm840, %v1597, 0
        %v1651 = vsel %vm840, %v1598, 0
        %v1654 = vsel %vm840, %v1599, 0
        %v1657 = vsel %vm840, %v1600, 0
        %v1660 = vsel %vm840, %v1601, 0
        %1662 = vmatprep.subr.mxu0 0.0
        %1663 = vmatpush1.msra.mxu0 %v1602
        %1664 = vmatprep.subr.mxu0 0.0
        %1665 = vmatpush1.msra.mxu0 %v1603
        %1666 = vmatprep.subr.mxu0 0.0
        %1667 = vmatpush1.msra.mxu0 %v1604
        %1668 = vmatprep.subr.mxu0 0.0
        %1669 = vmatpush1.msra.mxu0 %v1605
        %1670 = vmatprep.subr.mxu0 0.0
        %1671 = vmatpush1.msra.mxu0 %v1606
        %1672 = vmatprep.subr.mxu0 0.0
        %1673 = vmatpush1.msra.mxu0 %v1607
        %1674 = vmatprep.subr.mxu0 0.0
        %1675 = vmatpush1.msra.mxu0 %v1608
        %1676 = vmatprep.subr.mxu0 0.0
        %1677 = vmatpush1.msra.mxu0 %v1609
        %1678 = vmatprep.subr.mxu0 0.0
        %1679 = vmatpush1.msra.mxu0 %v1610
        %1680 = vmatprep.subr.mxu0 0.0
        %1681 = vmatpush1.msra.mxu0 %v1611
        %1682 = vmatprep.subr.mxu0 0.0
        %1683 = vmatpush1.msra.mxu0 %v1612
        %1684 = vmatprep.subr.mxu0 0.0
        %1685 = vmatpush1.msra.mxu0 %v1613
        %1686 = vmatprep.subr.mxu0 0.0
        %1687 = vmatpush1.msra.mxu0 0.0
        %1688 = vmatprep.subr.mxu0 0.0
        %1689 = vmatpush1.msra.mxu0 0.0
        %1690 = vmatprep.subr.mxu0 0.0
        %1691 = vmatpush1.msra.mxu0 0.0
        %1692 = vmatprep.subr.mxu0 0.0
        %1693 = vmatpush1.msra.mxu0 0.0
        %1694 = vmatprep.subr.mxu0 0.0
        %1695 = vmatpush1.msra.mxu0 0.0
        %1696 = vmatprep.subr.mxu0 0.0
        %1697 = vmatpush1.msra.mxu0 0.0
        %1698 = vmatprep.subr.mxu0 0.0
        %1699 = vmatpush1.msra.mxu0 0.0
        %1700 = vmatprep.subr.mxu0 0.0
        %1701 = vmatpush1.msra.mxu0 0.0
        %1702 = vmatprep.subr.mxu0 0.0
        %1703 = vmatpush1.msra.mxu0 0.0
        %1704 = vmatprep.subr.mxu0 0.0
        %1705 = vmatpush1.msra.mxu0 0.0
        %1706 = vmatprep.subr.mxu0 0.0
        %1707 = vmatpush1.msra.mxu0 0.0
        %1708 = vmatprep.subr.mxu0 0.0
        %1709 = vmatpush1.msra.mxu0 0.0
        %1710 = vmatprep.subr.mxu0 0.0
        %1711 = vmatpush1.msra.mxu0 0.0
        %1712 = vmatprep.subr.mxu0 0.0
        %1713 = vmatpush1.msra.mxu0 0.0
        %1714 = vmatprep.subr.mxu0 0.0
        %1715 = vmatpush1.msra.mxu0 0.0
        %1716 = vmatprep.subr.mxu0 0.0
        %1717 = vmatpush1.msra.mxu0 0.0
        %1718 = vmatprep.subr.mxu0 0.0
        %1719 = vmatpush1.msra.mxu0 0.0
        %1720 = vmatprep.subr.mxu0 0.0
        %1721 = vmatpush1.msra.mxu0 0.0
        %1722 = vmatprep.subr.mxu0 0.0
        %1723 = vmatpush1.msra.mxu0 0.0
        %1724 = vmatprep.subr.mxu0 0.0
        %1725 = vmatpush1.msra.mxu0 0.0
        %1726 = vmatprep.mubr.f32.mxu0 0.0
        %1727 = vmatmul.mubr.f32.gmra.mrb[0].mxu0 %v1615
        %v1728 = vpop.f32.mrb[0].mxu0
        %v1729 = vadd.f32 0.0, %v1728
        %v1730 = vpop.f32.mrb[0].mxu0
        %1731 = vmatprep.mubr.f32.mxu0 0.0
        %1732 = vmatmul.mubr.f32.gmra.mrb[0].mxu0 %v1618
        %v1733 = vpop.f32.mrb[0].mxu0
        %v1734 = vadd.f32 0.0, %v1733
        %v1735 = vpop.f32.mrb[0].mxu0
        %1736 = vmatprep.mubr.f32.mxu0 0.0
        %1737 = vmatmul.mubr.f32.gmra.mrb[0].mxu0 %v1621
        %v1738 = vpop.f32.mrb[0].mxu0
        %v1739 = vadd.f32 0.0, %v1738
        %v1740 = vpop.f32.mrb[0].mxu0
        %1741 = vmatprep.mubr.f32.mxu0 0.0
        %1742 = vmatmul.mubr.f32.gmra.mrb[0].mxu0 %v1624
        %v1743 = vpop.f32.mrb[0].mxu0
        %v1744 = vadd.f32 0.0, %v1743
        %v1745 = vpop.f32.mrb[0].mxu0
        %1746 = vmatprep.mubr.f32.mxu0 0.0
        %1747 = vmatmul.mubr.f32.gmra.mrb[0].mxu0 %v1627
        %v1748 = vpop.f32.mrb[0].mxu0
        %v1749 = vadd.f32 0.0, %v1748
        %v1750 = vpop.f32.mrb[0].mxu0
        %1751 = vmatprep.mubr.f32.mxu0 0.0
        %1752 = vmatmul.mubr.f32.gmra.mrb[0].mxu0 %v1630
        %v1753 = vpop.f32.mrb[0].mxu0
        %v1754 = vadd.f32 0.0, %v1753
        %v1755 = vpop.f32.mrb[0].mxu0
        %1756 = vmatprep.mubr.f32.mxu0 0.0
        %1757 = vmatmul.mubr.f32.gmra.mrb[0].mxu0 %v1633
        %v1758 = vpop.f32.mrb[0].mxu0
        %v1759 = vadd.f32 0.0, %v1758
        %v1760 = vpop.f32.mrb[0].mxu0
        %1761 = vmatprep.mubr.f32.mxu0 0.0
        %1762 = vmatmul.mubr.f32.gmra.mrb[0].mxu0 %v1636
        %v1763 = vpop.f32.mrb[0].mxu0
        %v1764 = vadd.f32 0.0, %v1763
        %v1765 = vpop.f32.mrb[0].mxu0
        %1766 = vmatprep.mubr.f32.mxu0 0.0
        %1767 = vmatmul.mubr.f32.gmra.mrb[0].mxu0 %v1639
        %v1768 = vpop.f32.mrb[0].mxu0
        %v1769 = vadd.f32 0.0, %v1768
        %v1770 = vpop.f32.mrb[0].mxu0
        %1771 = vmatprep.mubr.f32.mxu0 0.0
        %1772 = vmatmul.mubr.f32.gmra.mrb[0].mxu0 %v1642
        %v1773 = vpop.f32.mrb[0].mxu0
        %v1774 = vadd.f32 0.0, %v1773
        %v1775 = vpop.f32.mrb[0].mxu0
        %1776 = vmatprep.mubr.f32.mxu0 0.0
        %1777 = vmatmul.mubr.f32.gmra.mrb[0].mxu0 %v1645
        %v1778 = vpop.f32.mrb[0].mxu0
        %v1779 = vadd.f32 0.0, %v1778
        %v1780 = vpop.f32.mrb[0].mxu0
        %1781 = vmatprep.mubr.f32.mxu0 0.0
        %1782 = vmatmul.mubr.f32.gmra.mrb[0].mxu0 %v1648
        %v1783 = vpop.f32.mrb[0].mxu0
        %v1784 = vadd.f32 0.0, %v1783
        %v1785 = vpop.f32.mrb[0].mxu0
        %1786 = vmatprep.mubr.f32.mxu0 0.0
        %1787 = vmatmul.mubr.f32.gmra.mrb[0].mxu0 %v1651
        %v1788 = vpop.f32.mrb[0].mxu0
        %v1789 = vadd.f32 0.0, %v1788
        %v1790 = vpop.f32.mrb[0].mxu0
        %1791 = vmatprep.mubr.f32.mxu0 0.0
        %1792 = vmatmul.mubr.f32.gmra.mrb[0].mxu0 %v1654
        %v1793 = vpop.f32.mrb[0].mxu0
        %v1794 = vadd.f32 0.0, %v1793
        %v1795 = vpop.f32.mrb[0].mxu0
        %1796 = vmatprep.mubr.f32.mxu0 0.0
        %1797 = vmatmul.mubr.f32.gmra.mrb[0].mxu0 %v1657
        %v1798 = vpop.f32.mrb[0].mxu0
        %v1799 = vadd.f32 0.0, %v1798
        %v1800 = vpop.f32.mrb[0].mxu0
        %1801 = vmatprep.mubr.f32.mxu0 0.0
        %1802 = vmatmul.mubr.f32.gmra.mrb[0].mxu0 %v1660
        %v1803 = vpop.f32.mrb[0].mxu0
        %v1804 = vadd.f32 0.0, %v1803
        %v1805 = vpop.f32.mrb[0].mxu0
        %1806 = vdwg.mxu0
        %v1823 = vrot.slane %v1729, 7
        %v1824 = vrot.slane %v1734, 7
        %v1825 = vsel %vm1086, %v1823, %v1824
        %v1826 = vrot.slane %v1739, 7
        %v1827 = vrot.slane %v1744, 7
        %v1828 = vsel %vm1086, %v1826, %v1827
        %v1829 = vrot.slane %v1749, 7
        %v1830 = vrot.slane %v1754, 7
        %v1831 = vsel %vm1086, %v1829, %v1830
        %v1832 = vrot.slane %v1759, 7
        %v1833 = vrot.slane %v1764, 7
        %v1834 = vsel %vm1086, %v1832, %v1833
        %v1835 = vrot.slane %v1769, 7
        %v1836 = vrot.slane %v1774, 7
        %v1837 = vsel %vm1086, %v1835, %v1836
        %v1838 = vrot.slane %v1779, 7
        %v1839 = vrot.slane %v1784, 7
        %v1840 = vsel %vm1086, %v1838, %v1839
        %v1841 = vrot.slane %v1789, 7
        %v1842 = vrot.slane %v1794, 7
        %v1843 = vsel %vm1086, %v1841, %v1842
        %v1844 = vrot.slane %v1799, 7
        %v1845 = vrot.slane %v1804, 7
        %v1846 = vsel %vm1086, %v1844, %v1845
        %v1863 = vsel %vm1086, %v1729, %v1823
        %v1864 = vsel %vm1086, %v1739, %v1826
        %v1865 = vsel %vm1086, %v1749, %v1829
        %v1866 = vsel %vm1086, %v1759, %v1832
        %v1867 = vsel %vm1086, %v1769, %v1835
        %v1868 = vsel %vm1086, %v1779, %v1838
        %v1869 = vsel %vm1086, %v1789, %v1841
        %v1870 = vsel %vm1086, %v1799, %v1844
        %v1871 = vrot.slane %v1729, 1
        %v1872 = vrot.slane %v1734, 1
        %v1873 = vsel %vm1147, %v1871, %v1872
        %v1874 = vrot.slane %v1739, 1
        %v1875 = vrot.slane %v1744, 1
        %v1876 = vsel %vm1147, %v1874, %v1875
        %v1877 = vrot.slane %v1749, 1
        %v1878 = vrot.slane %v1754, 1
        %v1879 = vsel %vm1147, %v1877, %v1878
        %v1880 = vrot.slane %v1759, 1
        %v1881 = vrot.slane %v1764, 1
        %v1882 = vsel %vm1147, %v1880, %v1881
        %v1883 = vrot.slane %v1769, 1
        %v1884 = vrot.slane %v1774, 1
        %v1885 = vsel %vm1147, %v1883, %v1884
        %v1886 = vrot.slane %v1779, 1
        %v1887 = vrot.slane %v1784, 1
        %v1888 = vsel %vm1147, %v1886, %v1887
        %v1889 = vrot.slane %v1789, 1
        %v1890 = vrot.slane %v1794, 1
        %v1891 = vsel %vm1147, %v1889, %v1890
        %v1892 = vrot.slane %v1799, 1
        %v1893 = vrot.slane %v1804, 1
        %v1894 = vsel %vm1147, %v1892, %v1893
        %v1903 = vsel %vm1147, %v1872, %v1734
        %v1904 = vsel %vm1147, %v1875, %v1744
        %v1905 = vsel %vm1147, %v1878, %v1754
        %v1906 = vsel %vm1147, %v1881, %v1764
        %v1907 = vsel %vm1147, %v1884, %v1774
        %v1908 = vsel %vm1147, %v1887, %v1784
        %v1909 = vsel %vm1147, %v1890, %v1794
        %v1910 = vsel %vm1147, %v1893, %v1804
        %1911 = vrot.lane.b32.xlu0 %v1729, 96
        %v1912 = vpop.permute.xlu0 %1911
        %1913 = vrot.lane.b32.xlu0 %v1734, 96
        %v1914 = vpop.permute.xlu0 %1913
        %1915 = vrot.lane.b32.xlu0 %v1739, 96
        %v1916 = vpop.permute.xlu0 %1915
        %1917 = vrot.lane.b32.xlu0 %v1744, 96
        %v1918 = vpop.permute.xlu0 %1917
        %1919 = vrot.lane.b32.xlu0 %v1749, 96
        %v1920 = vpop.permute.xlu0 %1919
        %1921 = vrot.lane.b32.xlu0 %v1754, 96
        %v1922 = vpop.permute.xlu0 %1921
        %1923 = vrot.lane.b32.xlu0 %v1759, 96
        %v1924 = vpop.permute.xlu0 %1923
        %1925 = vrot.lane.b32.xlu0 %v1764, 96
        %v1926 = vpop.permute.xlu0 %1925
        %1927 = vrot.lane.b32.xlu0 %v1769, 96
        %v1928 = vpop.permute.xlu0 %1927
        %1929 = vrot.lane.b32.xlu0 %v1774, 96
        %v1930 = vpop.permute.xlu0 %1929
        %1931 = vrot.lane.b32.xlu0 %v1779, 96
        %v1932 = vpop.permute.xlu0 %1931
        %1933 = vrot.lane.b32.xlu0 %v1784, 96
        %v1934 = vpop.permute.xlu0 %1933
        %1935 = vrot.lane.b32.xlu0 %v1789, 96
        %v1936 = vpop.permute.xlu0 %1935
        %1937 = vrot.lane.b32.xlu0 %v1794, 96
        %v1938 = vpop.permute.xlu0 %1937
        %1939 = vrot.lane.b32.xlu0 %v1799, 96
        %v1940 = vpop.permute.xlu0 %1939
        %1941 = vrot.lane.b32.xlu0 %v1804, 96
        %v1942 = vpop.permute.xlu0 %1941
        %v1959 = vadd.f32 %v1863, %v1912
        %v1960 = vadd.f32 %v1825, %v1914
        %v1961 = vadd.f32 %v1864, %v1916
        %v1962 = vadd.f32 %v1828, %v1918
        %v1963 = vadd.f32 %v1865, %v1920
        %v1964 = vadd.f32 %v1831, %v1922
        %v1965 = vadd.f32 %v1866, %v1924
        %v1966 = vadd.f32 %v1834, %v1926
        %v1967 = vadd.f32 %v1867, %v1928
        %v1968 = vadd.f32 %v1837, %v1930
        %v1969 = vadd.f32 %v1868, %v1932
        %v1970 = vadd.f32 %v1840, %v1934
        %v1971 = vadd.f32 %v1869, %v1936
        %v1972 = vadd.f32 %v1843, %v1938
        %v1973 = vadd.f32 %v1870, %v1940
        %v1974 = vadd.f32 %v1846, %v1942
        %1983 = vrot.lane.b32.xlu0 %v1873, 64
        %v1984 = vpop.permute.xlu0 %1983
        %1985 = vrot.lane.b32.xlu0 %v1903, 64
        %v1986 = vpop.permute.xlu0 %1985
        %1987 = vrot.lane.b32.xlu0 %v1876, 64
        %v1988 = vpop.permute.xlu0 %1987
        %1989 = vrot.lane.b32.xlu0 %v1904, 64
        %v1990 = vpop.permute.xlu0 %1989
        %1991 = vrot.lane.b32.xlu0 %v1879, 64
        %v1992 = vpop.permute.xlu0 %1991
        %1993 = vrot.lane.b32.xlu0 %v1905, 64
        %v1994 = vpop.permute.xlu0 %1993
        %1995 = vrot.lane.b32.xlu0 %v1882, 64
        %v1996 = vpop.permute.xlu0 %1995
        %1997 = vrot.lane.b32.xlu0 %v1906, 64
        %v1998 = vpop.permute.xlu0 %1997
        %1999 = vrot.lane.b32.xlu0 %v1885, 64
        %v2000 = vpop.permute.xlu0 %1999
        %2001 = vrot.lane.b32.xlu0 %v1907, 64
        %v2002 = vpop.permute.xlu0 %2001
        %2003 = vrot.lane.b32.xlu0 %v1888, 64
        %v2004 = vpop.permute.xlu0 %2003
        %2005 = vrot.lane.b32.xlu0 %v1908, 64
        %v2006 = vpop.permute.xlu0 %2005
        %2007 = vrot.lane.b32.xlu0 %v1891, 64
        %v2008 = vpop.permute.xlu0 %2007
        %2009 = vrot.lane.b32.xlu0 %v1909, 64
        %v2010 = vpop.permute.xlu0 %2009
        %2011 = vrot.lane.b32.xlu0 %v1894, 64
        %v2012 = vpop.permute.xlu0 %2011
        %2013 = vrot.lane.b32.xlu0 %v1910, 64
        %v2014 = vpop.permute.xlu0 %2013
        %v2031 = vadd.f32 %v1959, %v1984
        %v2032 = vadd.f32 %v1960, %v1986
        %v2033 = vadd.f32 %v1961, %v1988
        %v2034 = vadd.f32 %v1962, %v1990
        %v2035 = vadd.f32 %v1963, %v1992
        %v2036 = vadd.f32 %v1964, %v1994
        %v2037 = vadd.f32 %v1965, %v1996
        %v2038 = vadd.f32 %v1966, %v1998
        %v2039 = vadd.f32 %v1967, %v2000
        %v2040 = vadd.f32 %v1968, %v2002
        %v2041 = vadd.f32 %v1969, %v2004
        %v2042 = vadd.f32 %v1970, %v2006
        %v2043 = vadd.f32 %v1971, %v2008
        %v2044 = vadd.f32 %v1972, %v2010
        %v2045 = vadd.f32 %v1973, %v2012
        %v2046 = vadd.f32 %v1974, %v2014
        %v2047 = vld [vmem:[%s4] sm:$0x1]
        %v2049 = vlaneseq
        %v2050 = vshrl.u32 %v2049, 7
        %v2051 = vsub.s32 0, %v2050
        %v2052 = vrot.slane %v2047, %v2051
        %v2054 = vadd.f32 %v2031, %v2052
        %v2055 = vadd.f32 %v2032, %v2052
        %v2056 = vadd.f32 %v2033, %v2052
        %v2057 = vadd.f32 %v2034, %v2052
        %v2058 = vadd.f32 %v2035, %v2052
        %v2059 = vadd.f32 %v2036, %v2052
        %v2060 = vadd.f32 %v2037, %v2052
        %v2061 = vadd.f32 %v2038, %v2052
        %v2062 = vadd.f32 %v2039, %v2052
        %v2063 = vadd.f32 %v2040, %v2052
        %v2064 = vadd.f32 %v2041, %v2052
        %v2065 = vadd.f32 %v2042, %v2052
        %v2066 = vadd.f32 %v2043, %v2052
        %v2067 = vadd.f32 %v2044, %v2052
        %v2068 = vadd.f32 %v2045, %v2052
        %v2069 = vadd.f32 %v2046, %v2052
        %s2070 = smul.u32 %s316, 16
        %s2071 = scalar_lea.vmem %s277, %s2070 [#allocation3]
        %v2072 = vld [vmem:[%s2071] sm:$0xff]
        %v2073 = vld [vmem:[%s2071 + $0x8] sm:$0xff]
        %v2074 = vld [vmem:[%s2071 + $0x10] sm:$0xff]
        %v2075 = vld [vmem:[%s2071 + $0x18] sm:$0xff]
        %v2076 = vld [vmem:[%s2071 + $0x20] sm:$0xff]
        %v2077 = vld [vmem:[%s2071 + $0x28] sm:$0xff]
        %v2078 = vld [vmem:[%s2071 + $0x30] sm:$0xff]
        %v2079 = vld [vmem:[%s2071 + $0x38] sm:$0xff]
        %v2080 = vld [vmem:[%s2071 + $0x40] sm:$0xff]
        %v2081 = vld [vmem:[%s2071 + $0x48] sm:$0xff]
        %v2082 = vld [vmem:[%s2071 + $0x50] sm:$0xff]
        %v2083 = vld [vmem:[%s2071 + $0x58] sm:$0xff]
        %v2084 = vld [vmem:[%s2071 + $0x60] sm:$0xff]
        %v2085 = vld [vmem:[%s2071 + $0x68] sm:$0xff]
        %v2086 = vld [vmem:[%s2071 + $0x70] sm:$0xff]
        %v2087 = vld [vmem:[%s2071 + $0x78] sm:$0xff]
        %v2088 = vadd.f32 %v2072, %v2054
        %v2089 = vadd.f32 %v2073, %v2055
        %v2090 = vadd.f32 %v2074, %v2056
        %v2091 = vadd.f32 %v2075, %v2057
        %v2092 = vadd.f32 %v2076, %v2058
        %v2093 = vadd.f32 %v2077, %v2059
        %v2094 = vadd.f32 %v2078, %v2060
        %v2095 = vadd.f32 %v2079, %v2061
        %v2096 = vadd.f32 %v2080, %v2062
        %v2097 = vadd.f32 %v2081, %v2063
        %v2098 = vadd.f32 %v2082, %v2064
        %v2099 = vadd.f32 %v2083, %v2065
        %v2100 = vadd.f32 %v2084, %v2066
        %v2101 = vadd.f32 %v2085, %v2067
        %v2102 = vadd.f32 %v2086, %v2068
        %v2103 = vadd.f32 %v2087, %v2069
        %vm2104 = vcmp.ge.f32.partialorder %v2088, 0.0
        %vm2105 = vcmp.ge.f32.partialorder %v2089, 0.0
        %vm2106 = vcmp.ge.f32.partialorder %v2090, 0.0
        %vm2107 = vcmp.ge.f32.partialorder %v2091, 0.0
        %vm2108 = vcmp.ge.f32.partialorder %v2092, 0.0
        %vm2109 = vcmp.ge.f32.partialorder %v2093, 0.0
        %vm2110 = vcmp.ge.f32.partialorder %v2094, 0.0
        %vm2111 = vcmp.ge.f32.partialorder %v2095, 0.0
        %vm2112 = vcmp.ge.f32.partialorder %v2096, 0.0
        %vm2113 = vcmp.ge.f32.partialorder %v2097, 0.0
        %vm2114 = vcmp.ge.f32.partialorder %v2098, 0.0
        %vm2115 = vcmp.ge.f32.partialorder %v2099, 0.0
        %vm2116 = vcmp.ge.f32.partialorder %v2100, 0.0
        %vm2117 = vcmp.ge.f32.partialorder %v2101, 0.0
        %vm2118 = vcmp.ge.f32.partialorder %v2102, 0.0
        %vm2119 = vcmp.ge.f32.partialorder %v2103, 0.0
        %v2120 = vmul.f32 %v1415, %v2088
        %v2121 = vmul.f32 %v1415, %v2089
        %v2122 = vmul.f32 %v1415, %v2090
        %v2123 = vmul.f32 %v1415, %v2091
        %v2124 = vmul.f32 %v1415, %v2092
        %v2125 = vmul.f32 %v1415, %v2093
        %v2126 = vmul.f32 %v1415, %v2094
        %v2127 = vmul.f32 %v1415, %v2095
        %v2128 = vmul.f32 %v1415, %v2096
        %v2129 = vmul.f32 %v1415, %v2097
        %v2130 = vmul.f32 %v1415, %v2098
        %v2131 = vmul.f32 %v1415, %v2099
        %v2132 = vmul.f32 %v1415, %v2100
        %v2133 = vmul.f32 %v1415, %v2101
        %v2134 = vmul.f32 %v1415, %v2102
        %v2135 = vmul.f32 %v1415, %v2103
        %v2136 = vsel %vm2104, %v2088, %v2120
        %v2137 = vsel %vm2105, %v2089, %v2121
        %v2138 = vsel %vm2106, %v2090, %v2122
        %v2139 = vsel %vm2107, %v2091, %v2123
        %v2140 = vsel %vm2108, %v2092, %v2124
        %v2141 = vsel %vm2109, %v2093, %v2125
        %v2142 = vsel %vm2110, %v2094, %v2126
        %v2143 = vsel %vm2111, %v2095, %v2127
        %v2144 = vsel %vm2112, %v2096, %v2128
        %v2145 = vsel %vm2113, %v2097, %v2129
        %v2146 = vsel %vm2114, %v2098, %v2130
        %v2147 = vsel %vm2115, %v2099, %v2131
        %v2148 = vsel %vm2116, %v2100, %v2132
        %v2149 = vsel %vm2117, %v2101, %v2133
        %v2150 = vsel %vm2118, %v2102, %v2134
        %v2151 = vsel %vm2119, %v2103, %v2135
        %2152 = vst.msk [vmem:[%s313] sm:$0xff] %vm786, %v2136
        %2153 = vst.msk [vmem:[%s313 + $0x8] sm:$0xff] %vm786, %v2137
        %2154 = vst.msk [vmem:[%s313 + $0x10] sm:$0xff] %vm786, %v2138
        %2155 = vst.msk [vmem:[%s313 + $0x18] sm:$0xff] %vm786, %v2139
        %2156 = vst.msk [vmem:[%s313 + $0x20] sm:$0xff] %vm786, %v2140
        %2157 = vst.msk [vmem:[%s313 + $0x28] sm:$0xff] %vm786, %v2141
        %2158 = vst.msk [vmem:[%s313 + $0x30] sm:$0xff] %vm786, %v2142
        %2159 = vst.msk [vmem:[%s313 + $0x38] sm:$0xff] %vm786, %v2143
        %2160 = vst.msk [vmem:[%s313 + $0x40] sm:$0xff] %vm786, %v2144
        %2161 = vst.msk [vmem:[%s313 + $0x48] sm:$0xff] %vm786, %v2145
        %2162 = vst.msk [vmem:[%s313 + $0x50] sm:$0xff] %vm786, %v2146
        %2163 = vst.msk [vmem:[%s313 + $0x58] sm:$0xff] %vm786, %v2147
        %2164 = vst.msk [vmem:[%s313 + $0x60] sm:$0xff] %vm786, %v2148
        %2165 = vst.msk [vmem:[%s313 + $0x68] sm:$0xff] %vm786, %v2149
        %2166 = vst.msk [vmem:[%s313 + $0x70] sm:$0xff] %vm786, %v2150
        %2167 = vst.msk [vmem:[%s313 + $0x78] sm:$0xff] %vm786, %v2151
        %s2168 = sand.u32 %s178, 1
        %s2169 = scalar_lea.sflag [#allocation5], %s2168
        %s2170 = sand.u32 %s178, 1
        %s2171 = smul.addr %s2170, 128
        %s2172 = scalar_lea.vmem [#allocation9], %s2171
        // Predicated region
        $region57: #{tpu_custom_call.1} parent=43 // pred_check
          %p2173 = pneg %p188
        $region58: #{tpu_custom_call.1} parent=43 // pred_check_branch
          %2175 = sbr.rel (%p2173) target = $region60
        $region59: #{tpu_custom_call.1} parent=43 // pred_region
          %s2176 = smul.u32 8, %s30
          %s2178 = ssub.s32 2048, 2048
          %2179 = vsyncadd %s2169, %s2178
          %s2180 = smul.addr %s2176, 2
          %s2181 = smul.addr %s29, 32
          %s2182 = sadd.s32 %s2180, %s2181
          %s2183 = smul.addr %s2182, 128
          %s2184 = scalar_lea.hbm %s6, %s2183
          %s2185 = sshll.u32 %s2172, 4
          %s2186 = int_to_ptr.vmem [resolvable:$true] %s2185
          %2191 = dma.vmem_to_hbm [thread:$0]  %s2186, 2048, %s2184, %s2169, 128, 128, 8
        $region60: #{tpu_custom_call.1} parent=43 // pred_fallthru
          _
      $region44: #{tpu_custom_call.1} parent=5 // pred_fallthru
        _
      %p2192 = scmp.le.s32.totalorder 2, %s20
      // Predicated region
      $region61: #{tpu_custom_call.1} parent=5 // pred_check
        %p2193 = pneg %p2192
      $region62: #{tpu_custom_call.1} parent=5 // pred_check_branch
        %2195 = sbr.rel (%p2193) target = $region64
      $region63: #{tpu_custom_call.1} parent=5 // pred_region
        %s2196 = ssub.s32 %s20, 2
        // Predicated region
        $region65: #{tpu_custom_call.1} parent=63 // pred_check
          %p2197 = pneg %p194
        $region66: #{tpu_custom_call.1} parent=63 // pred_check_branch
          %2199 = sbr.rel (%p2197) target = $region68
        $region67: #{tpu_custom_call.1} parent=63 // pred_region
          %s2200 = sand.u32 %s179, 1
          %s2201 = scalar_lea.sflag [#allocation5], %s2200
          %s2202 = sand.u32 %s179, 1
          %s2203 = smul.addr %s2202, 128
          %s2204 = scalar_lea.vmem [#allocation9], %s2203
          %2205 = dma.done %s2201, 2048
        $region68: #{tpu_custom_call.1} parent=63 // pred_fallthru
          _
      $region64: #{tpu_custom_call.1} parent=5 // pred_fallthru
        _
    $region6: #{tpu_custom_call.1} parent=1 // loop_footer
      %s24 = sadd.s32 1, %s20
    $region7: #{tpu_custom_call.1} parent=1 // loop_footer_branch
      %19 = sbr.rel target = $region3
    $region8: #{tpu_custom_call.1} parent=1 // loop_exit
      _
    %2206 = vsyncpa [#allocation4], 1
    %s2207 = scalar_lea.sflag [#allocation4], 1
    %2208 = vsyncpa %s2207, 1
    %2209 = vsyncpa [#allocation7], 1
    %2210 = vsyncpa [#allocation5], 1
    %s2211 = scalar_lea.sflag [#allocation5], 1
    %2212 = vsyncpa %s2211, 1

</llo_original>
